<compile_context>
chip_gen: v5e
topology: v5e:2x2
jax: 0.10.0
libtpu: 0.0.40
codegen_flags: <defaults>
</compile_context>

<pallas_src>
import functools

import jax
import jax.numpy as jnp
from jax import lax
from jax.experimental import pallas as pl
from jax.experimental.pallas import tpu as pltpu


def _erf(x):
    # Abramowitz & Stegun 7.1.26 rational approximation, |err| < 1.5e-7.
    # Keeps the in-kernel op set to plain VPU/EUP math (mul/add/exp/select).
    p = 0.3275911
    a1, a2, a3, a4, a5 = (0.254829592, -0.284496736, 1.421413741,
                          -1.453152027, 1.061405429)
    sgn = jnp.where(x >= 0.0, 1.0, -1.0)
    ax = jnp.abs(x)
    t = 1.0 / (1.0 + p * ax)
    poly = ((((a5 * t + a4) * t + a3) * t + a2) * t + a1) * t
    return sgn * (1.0 - poly * jnp.exp(-ax * ax))


def _gelu_exact(x):
    # nn.GELU default = exact erf GELU (NOT the tanh approximation).
    return 0.5 * x * (1.0 + _erf(x * 0.7071067811865476))


def feature_selector_kernel(
    x_ref, cls_ref,
    vecs_ref, f1b_ref,
    qw_ref, kw_ref, vw_ref, pw_ref, f1w_ref, f2w_ref,
    xcls_out_ref, attn_out_ref,
    *, num_heads, scale, eps,
):
    tb, n, c = x_ref.shape
    n1 = n + 1
    nh = num_heads
    hd = c // nh
    n1_pad = attn_out_ref.shape[-1]

    x = x_ref[...].astype(jnp.float32)        # (tb, n, c)
    cls = cls_ref[...].astype(jnp.float32)    # (tb, c)

    # packed per-channel vectors: rows = n1_w, n1_b, n2_w, n2_b, g1, g2, pb, f2b
    n1_w = vecs_ref[0:1, :]
    n1_b = vecs_ref[1:2, :]
    n2_w = vecs_ref[2:3, :]
    n2_b = vecs_ref[3:4, :]
    g1 = vecs_ref[4:5, :]
    g2 = vecs_ref[5:6, :]
    proj_b = vecs_ref[6:7, :]
    fc2_b = vecs_ref[7:8, :]

    # ---- u = concat([x_cls, x], dim=1), done in VMEM (no HBM concat copy) ----
    u = jnp.concatenate([cls[:, None, :], x], axis=1)             # (tb, n1, c)

    # ---- norm1 (f32, biased variance, eps=1e-5) ----
    mu = jnp.mean(u, axis=-1, keepdims=True)
    var = jnp.mean(jnp.square(u - mu), axis=-1, keepdims=True)
    un = (u - mu) * lax.rsqrt(var + eps) * n1_w + n1_b            # (tb, n1, c)

    # ---- q / k / v projections: bf16 operands, f32 accumulation on the MXU ----
    un_bf = un.astype(jnp.bfloat16)
    un2 = un_bf.reshape(tb * n1, c)
    k = jnp.dot(un2, kw_ref[...],
                preferred_element_type=jnp.float32).reshape(tb, n1, c)
    v = jnp.dot(un2, vw_ref[...],
                preferred_element_type=jnp.float32).reshape(tb, n1, c)
    q = jnp.dot(un_bf[:, 0, :], qw_ref[...],
                preferred_element_type=jnp.float32) * scale        # (tb, c)

    # ---- multi-head attention without a per-head loop ----
    # seg[c, h] = 1 iff channel c belongs to head h; seg_t is its transpose.
    ci = lax.broadcasted_iota(jnp.int32, (c, nh), 0)
    hi = lax.broadcasted_iota(jnp.int32, (c, nh), 1)
    seg = jnp.logical_and(ci >= hi * hd, ci < (hi + 1) * hd).astype(jnp.float32)
    hi_t = lax.broadcasted_iota(jnp.int32, (nh, c), 0)
    ci_t = lax.broadcasted_iota(jnp.int32, (nh, c), 1)
    seg_t = jnp.logical_and(ci_t >= hi_t * hd,
                            ci_t < (hi_t + 1) * hd).astype(jnp.float32)

    # scores[b, n, h] = sum over head-h channels of q[b, :] * k[b, n, :]
    qk = q[:, None, :] * k                                         # (tb, n1, c)
    s = jnp.dot(qk.reshape(tb * n1, c), seg,
                preferred_element_type=jnp.float32).reshape(tb, n1, nh)

    # softmax over the key axis (axis=1), denominator reciprocal on the EUP
    m = jnp.max(s, axis=1, keepdims=True)
    e = jnp.exp(s - m)
    d = jnp.sum(e, axis=1, keepdims=True)
    p = e * pl.reciprocal(d, approx=True)                          # (tb, n1, nh)

    # context: broadcast head weights back over their channels, reduce keys
    p_c = jnp.dot(p.reshape(tb * n1, nh), seg_t,
                  preferred_element_type=jnp.float32).reshape(tb, n1, c)
    ctx = jnp.sum(p_c * v, axis=1)                                 # (tb, c)

    proj = jnp.dot(ctx.astype(jnp.bfloat16), pw_ref[...],
                   preferred_element_type=jnp.float32) + proj_b

    # ---- residual 1 (drop_path / dropout = identity at rate 0) ----
    xc = cls + g1 * proj                                           # (tb, c)

    # ---- norm2 + Mlp ----
    mu2 = jnp.mean(xc, axis=-1, keepdims=True)
    var2 = jnp.mean(jnp.square(xc - mu2), axis=-1, keepdims=True)
    xn2 = (xc - mu2) * lax.rsqrt(var2 + eps) * n2_w + n2_b

    h1 = jnp.dot(xn2.astype(jnp.bfloat16), f1w_ref[...],
                 preferred_element_type=jnp.float32) + f1b_ref[...]
    h1 = _gelu_exact(h1)
    mlp = jnp.dot(h1.astype(jnp.bfloat16), f2w_ref[...],
                  preferred_element_type=jnp.float32) + fc2_b

    # ---- residual 2 ----
    xcls_out_ref[...] = xc + g2 * mlp

    # ---- attention weights: one lane-dense store, key axis padded to n1_pad ----
    p_t = jnp.transpose(p, (0, 2, 1))                              # (tb, nh, n1)
    if n1_pad > n1:
        p_t = jnp.concatenate(
            [p_t, jnp.zeros((tb, nh, n1_pad - n1), jnp.float32)], axis=-1)
    attn_out_ref[...] = p_t


def feature_selector(x, x_cls, params, num_heads, *, block_b=32):
    """x: (B, N, C) f32, x_cls: (B, 1, C) f32 -> (x_cls_out (B,1,C), attn (B,H,1,N+1))."""
    B, N, C = x.shape
    assert C % num_heads == 0
    N1 = N + 1
    H4 = params["fc1_w"].shape[0]
    scale = float((C // num_heads) ** -0.5)

    # batch blocking: tb rows per grid step (multiple of 8 when B is blocked)
    if B <= block_b:
        tb = B
    else:
        tb = max(8, (block_b // 8) * 8)
    B_pad = pl.cdiv(B, tb) * tb
    n1_pad = pl.cdiv(N1, 128) * 128           # lane-dense attention output

    x3 = x.astype(jnp.float32)
    cls2 = x_cls.reshape(B, C).astype(jnp.float32)
    if B_pad != B:
        x3 = jnp.pad(x3, ((0, B_pad - B), (0, 0), (0, 0)))
        cls2 = jnp.pad(cls2, ((0, B_pad - B), (0, 0)))

    # pack the eight (1, C) vectors into a single (8, C) input
    vecs = jnp.concatenate([
        params["n1_w"], params["n1_b"], params["n2_w"], params["n2_b"],
        params["gamma_1"], params["gamma_2"], params["proj_b"], params["fc2_b"],
    ], axis=0).astype(jnp.float32)

    # pre-transposed (in, out) bf16 weights for the MXU (no in-kernel .T)
    qw = params["q_w"].T.astype(jnp.bfloat16)
    kw = params["k_w"].T.astype(jnp.bfloat16)
    vw = params["v_w"].T.astype(jnp.bfloat16)
    pw = params["proj_w"].T.astype(jnp.bfloat16)
    f1w = params["fc1_w"].T.astype(jnp.bfloat16)   # (C, H4)
    f2w = params["fc2_w"].T.astype(jnp.bfloat16)   # (H4, C)
    f1b = params["fc1_b"].astype(jnp.float32)      # (1, H4)

    kernel = functools.partial(feature_selector_kernel,
                               num_heads=num_heads, scale=scale, eps=1e-5)

    def rep(shape):  # replicated 2-D (weight) spec, constant block index
        return pl.BlockSpec(shape, lambda b: (0, 0))

    xcls_flat, attn_p = pl.pallas_call(
        kernel,
        out_shape=(
            jax.ShapeDtypeStruct((B_pad, C), jnp.float32),
            jax.ShapeDtypeStruct((B_pad, num_heads, n1_pad), jnp.float32),
        ),
        grid_spec=pltpu.PrefetchScalarGridSpec(
            num_scalar_prefetch=0,
            grid=(B_pad // tb,),
            in_specs=[
                pl.BlockSpec((tb, N, C), lambda b: (b, 0, 0)),   # x
                pl.BlockSpec((tb, C), lambda b: (b, 0)),         # x_cls
                rep((8, C)),                                     # packed vectors
                rep((1, H4)),                                    # fc1 bias
                rep((C, C)), rep((C, C)), rep((C, C)), rep((C, C)),  # q,k,v,proj
                rep((C, H4)), rep((H4, C)),                      # fc1, fc2
            ],
            out_specs=(
                pl.BlockSpec((tb, C), lambda b: (b, 0)),
                pl.BlockSpec((tb, num_heads, n1_pad), lambda b: (b, 0, 0)),
            ),
        ),
        compiler_params=pltpu.CompilerParams(
            dimension_semantics=("parallel",),
            vmem_limit_bytes=48 * 1024 * 1024,
        ),
    )(x3, cls2, vecs, f1b, qw, kw, vw, pw, f1w, f2w)

    x_cls_out = xcls_flat[:B].reshape(B, 1, C)
    attn = attn_p[:B, :, :N1][:, :, None, :]        # (B, H, 1, N+1)
    return x_cls_out, attn


def reference(x, x_cls, p, num_heads, eps=1e-5):
    """Pure-JAX f32 reference mirroring the PyTorch forward."""
    B, N, C = x.shape
    u = jnp.concatenate([x_cls, x], axis=1)

    def ln(t, w, b):
        m = t.mean(-1, keepdims=True)
        v = ((t - m) ** 2).mean(-1, keepdims=True)
        return (t - m) / jnp.sqrt(v + eps) * w[0] + b[0]

    un = ln(u, p["n1_w"], p["n1_b"])
    hd = C // num_heads
    scale = hd ** -0.5
    q = un[:, 0:1] @ p["q_w"].T
    k = un @ p["k_w"].T
    v = un @ p["v_w"].T
    q = q.reshape(B, 1, num_heads, hd).transpose(0, 2, 1, 3) * scale
    k = k.reshape(B, N + 1, num_heads, hd).transpose(0, 2, 1, 3)
    v = v.reshape(B, N + 1, num_heads, hd).transpose(0, 2, 1, 3)
    attn = jax.nn.softmax(q @ k.transpose(0, 1, 3, 2), axis=-1)   # (B,H,1,N+1)
    xc = (attn @ v).transpose(0, 2, 1, 3).reshape(B, 1, C)
    xc = xc @ p["proj_w"].T + p["proj_b"][0]
    x_cls1 = x_cls + p["gamma_1"][0] * xc
    n2 = ln(x_cls1, p["n2_w"], p["n2_b"])
    h1 = jax.nn.gelu(n2 @ p["fc1_w"].T + p["fc1_b"][0], approximate=False)
    m = h1 @ p["fc2_w"].T + p["fc2_b"][0]
    return x_cls1 + p["gamma_2"][0] * m, attn


def make_params(key, dim, num_heads, mlp_ratio=4.0, init_values=1e-4):
    H = int(dim * mlp_ratio)
    ks = jax.random.split(key, 8)
    s = 0.05
    return {
        "n1_w": jnp.ones((1, dim), jnp.float32),
        "n1_b": jnp.zeros((1, dim), jnp.float32),
        "q_w": s * jax.random.normal(ks[0], (dim, dim), jnp.float32),
        "k_w": s * jax.random.normal(ks[1], (dim, dim), jnp.float32),
        "v_w": s * jax.random.normal(ks[2], (dim, dim), jnp.float32),
        "proj_w": s * jax.random.normal(ks[3], (dim, dim), jnp.float32),
        "proj_b": s * jax.random.normal(ks[4], (1, dim), jnp.float32),
        "gamma_1": init_values * jnp.ones((1, dim), jnp.float32),
        "n2_w": jnp.ones((1, dim), jnp.float32),
        "n2_b": jnp.zeros((1, dim), jnp.float32),
        "fc1_w": s * jax.random.normal(ks[5], (H, dim), jnp.float32),
        "fc1_b": jnp.zeros((1, H), jnp.float32),
        "fc2_w": s * jax.random.normal(ks[6], (dim, H), jnp.float32),
        "fc2_b": jnp.zeros((1, dim), jnp.float32),
        "gamma_2": init_values * jnp.ones((1, dim), jnp.float32),
    }


if __name__ == "__main__":
    B, N, C = 2, 8, 32
    num_heads = 2

    key = jax.random.PRNGKey(0)
    kx, kc, kp = jax.random.split(key, 3)
    x = jax.random.normal(kx, (B, N, C), jnp.float32)
    x_cls = jax.random.normal(kc, (B, 1, C), jnp.float32)
    # larger init_values than the 1e-4 module default so the residual branches
    # actually contribute to the numerical check
    params = make_params(kp, C, num_heads, init_values=0.5)

    x_cls_out, attn = feature_selector(x, x_cls, params, num_heads)
    x_cls_out = jax.block_until_ready(x_cls_out)
    attn = jax.block_until_ready(attn)

    ref_cls, ref_attn = reference(x, x_cls, params, num_heads)

    assert x_cls_out.shape == (B, 1, C)
    assert attn.shape == (B, num_heads, 1, N + 1)
    assert jnp.allclose(x_cls_out, ref_cls, atol=2e-2, rtol=2e-2), float(
        jnp.max(jnp.abs(x_cls_out - ref_cls)))
    assert jnp.allclose(attn, ref_attn, atol=2e-2, rtol=2e-2), float(
        jnp.max(jnp.abs(attn - ref_attn)))

    print("KERNEL_OK")
</pallas_src>

<mosaic_0001>
module attributes {stable_mosaic.version = 11 : i64} {
  func.func @feature_selector_kernel(%arg0: i32, %arg1: memref<2x8x32xf32, #tpu.memory_space<vmem>>, %arg2: memref<2x32xf32, #tpu.memory_space<vmem>>, %arg3: memref<8x32xf32, #tpu.memory_space<vmem>>, %arg4: memref<1x128xf32, #tpu.memory_space<vmem>>, %arg5: memref<32x32xbf16, #tpu.memory_space<vmem>>, %arg6: memref<32x32xbf16, #tpu.memory_space<vmem>>, %arg7: memref<32x32xbf16, #tpu.memory_space<vmem>>, %arg8: memref<32x32xbf16, #tpu.memory_space<vmem>>, %arg9: memref<32x128xbf16, #tpu.memory_space<vmem>>, %arg10: memref<128x32xbf16, #tpu.memory_space<vmem>>, %arg11: memref<2x32xf32, #tpu.memory_space<vmem>>, %arg12: memref<2x2x128xf32, #tpu.memory_space<vmem>>) attributes {dimension_semantics = [#tpu.dimension_semantics<parallel>], iteration_bounds = array<i64: 1>, scalar_prefetch = 0 : i64, scratch_operands = 0 : i64, tpu.core_type = #tpu.core_type<tc>, window_params = [{transform_indices = @transform_0, window_bounds = array<i64: 2, 8, 32>}, {transform_indices = @transform_1, window_bounds = array<i64: 2, 32>}, {pipeline_mode = #tpu.pipeline_mode<synchronous>, transform_indices = @transform_2, window_bounds = array<i64: 8, 32>}, {pipeline_mode = #tpu.pipeline_mode<synchronous>, transform_indices = @transform_3, window_bounds = array<i64: 1, 128>}, {pipeline_mode = #tpu.pipeline_mode<synchronous>, transform_indices = @transform_4, window_bounds = array<i64: 32, 32>}, {pipeline_mode = #tpu.pipeline_mode<synchronous>, transform_indices = @transform_5, window_bounds = array<i64: 32, 32>}, {pipeline_mode = #tpu.pipeline_mode<synchronous>, transform_indices = @transform_6, window_bounds = array<i64: 32, 32>}, {pipeline_mode = #tpu.pipeline_mode<synchronous>, transform_indices = @transform_7, window_bounds = array<i64: 32, 32>}, {pipeline_mode = #tpu.pipeline_mode<synchronous>, transform_indices = @transform_8, window_bounds = array<i64: 32, 128>}, {pipeline_mode = #tpu.pipeline_mode<synchronous>, transform_indices = @transform_9, window_bounds = array<i64: 128, 32>}, {transform_indices = @transform_10, window_bounds = array<i64: 2, 32>}, {transform_indices = @transform_11, window_bounds = array<i64: 2, 2, 128>}]} {
    %c0 = arith.constant 0 : index
    %c0_0 = arith.constant 0 : index
    %c0_1 = arith.constant 0 : index
    %0 = vector.load %arg1[%c0, %c0_0, %c0_1] : memref<2x8x32xf32, #tpu.memory_space<vmem>>, vector<2x8x32xf32>
    %c0_2 = arith.constant 0 : index
    %c0_3 = arith.constant 0 : index
    %1 = vector.load %arg2[%c0_2, %c0_3] : memref<2x32xf32, #tpu.memory_space<vmem>>, vector<2x32xf32>
    %c0_4 = arith.constant 0 : index
    %c0_5 = arith.constant 0 : index
    %2 = vector.load %arg3[%c0_4, %c0_5] : memref<8x32xf32, #tpu.memory_space<vmem>>, vector<1x32xf32>
    %c1 = arith.constant 1 : index
    %c0_6 = arith.constant 0 : index
    %3 = vector.load %arg3[%c1, %c0_6] : memref<8x32xf32, #tpu.memory_space<vmem>>, vector<1x32xf32>
    %c2 = arith.constant 2 : index
    %c0_7 = arith.constant 0 : index
    %4 = vector.load %arg3[%c2, %c0_7] : memref<8x32xf32, #tpu.memory_space<vmem>>, vector<1x32xf32>
    %c3 = arith.constant 3 : index
    %c0_8 = arith.constant 0 : index
    %5 = vector.load %arg3[%c3, %c0_8] : memref<8x32xf32, #tpu.memory_space<vmem>>, vector<1x32xf32>
    %c4 = arith.constant 4 : index
    %c0_9 = arith.constant 0 : index
    %6 = vector.load %arg3[%c4, %c0_9] : memref<8x32xf32, #tpu.memory_space<vmem>>, vector<1x32xf32>
    %c5 = arith.constant 5 : index
    %c0_10 = arith.constant 0 : index
    %7 = vector.load %arg3[%c5, %c0_10] : memref<8x32xf32, #tpu.memory_space<vmem>>, vector<1x32xf32>
    %c6 = arith.constant 6 : index
    %c0_11 = arith.constant 0 : index
    %8 = vector.load %arg3[%c6, %c0_11] : memref<8x32xf32, #tpu.memory_space<vmem>>, vector<1x32xf32>
    %c7 = arith.constant 7 : index
    %c0_12 = arith.constant 0 : index
    %9 = vector.load %arg3[%c7, %c0_12] : memref<8x32xf32, #tpu.memory_space<vmem>>, vector<1x32xf32>
    %10 = vector.shape_cast %1 : vector<2x32xf32> to vector<2x1x32xf32>
    %11 = tpu.concatenate %10, %0 in 1 : vector<2x1x32xf32>, vector<2x8x32xf32> -> vector<2x9x32xf32>
    %cst = arith.constant dense<0.000000e+00> : vector<2x9xf32>
    %12 = vector.multi_reduction <add>, %11, %cst [2] : vector<2x9x32xf32> to vector<2x9xf32>
    %13 = vector.shape_cast %12 : vector<2x9xf32> to vector<2x9x1xf32>
    %cst_13 = arith.constant 3.200000e+01 : f32
    %14 = vector.broadcast %cst_13 : f32 to vector<2x9x1xf32>
    %15 = arith.divf %13, %14 : vector<2x9x1xf32>
    %16 = vector.broadcast %15 : vector<2x9x1xf32> to vector<2x9x32xf32>
    %17 = arith.subf %11, %16 : vector<2x9x32xf32>
    %18 = arith.mulf %17, %17 : vector<2x9x32xf32>
    %cst_14 = arith.constant dense<0.000000e+00> : vector<2x9xf32>
    %19 = vector.multi_reduction <add>, %18, %cst_14 [2] : vector<2x9x32xf32> to vector<2x9xf32>
    %20 = vector.shape_cast %19 : vector<2x9xf32> to vector<2x9x1xf32>
    %cst_15 = arith.constant 3.200000e+01 : f32
    %21 = vector.broadcast %cst_15 : f32 to vector<2x9x1xf32>
    %22 = arith.divf %20, %21 : vector<2x9x1xf32>
    %23 = vector.broadcast %15 : vector<2x9x1xf32> to vector<2x9x32xf32>
    %24 = arith.subf %11, %23 : vector<2x9x32xf32>
    %cst_16 = arith.constant 9.99999974E-6 : f32
    %25 = vector.broadcast %cst_16 : f32 to vector<2x9x1xf32>
    %26 = arith.addf %22, %25 : vector<2x9x1xf32>
    %27 = math.rsqrt %26 : vector<2x9x1xf32>
    %28 = vector.broadcast %27 : vector<2x9x1xf32> to vector<2x9x32xf32>
    %29 = arith.mulf %24, %28 : vector<2x9x32xf32>
    %30 = vector.shape_cast %2 : vector<1x32xf32> to vector<1x1x32xf32>
    %31 = vector.broadcast %30 : vector<1x1x32xf32> to vector<2x9x32xf32>
    %32 = arith.mulf %29, %31 : vector<2x9x32xf32>
    %33 = vector.shape_cast %3 : vector<1x32xf32> to vector<1x1x32xf32>
    %34 = vector.broadcast %33 : vector<1x1x32xf32> to vector<2x9x32xf32>
    %35 = arith.addf %32, %34 : vector<2x9x32xf32>
    %36 = arith.truncf %35 : vector<2x9x32xf32> to vector<2x9x32xbf16>
    %37 = vector.shape_cast %36 : vector<2x9x32xbf16> to vector<18x32xbf16>
    %c0_17 = arith.constant 0 : index
    %c0_18 = arith.constant 0 : index
    %38 = vector.load %arg6[%c0_17, %c0_18] : memref<32x32xbf16, #tpu.memory_space<vmem>>, vector<32x32xbf16>
    %cst_19 = arith.constant dense<0.000000e+00> : vector<18x32xf32>
    %39 = tpu.matmul %37, %38, %cst_19 {dimension_numbers = #tpu.dot_dimension_numbers<[1], [0], [0], [1], [0, 0, 1, 1], [], []>} : vector<18x32xbf16>, vector<32x32xbf16>, vector<18x32xf32> -> vector<18x32xf32>
    %40 = vector.shape_cast %39 : vector<18x32xf32> to vector<2x9x32xf32>
    %c0_20 = arith.constant 0 : index
    %c0_21 = arith.constant 0 : index
    %41 = vector.load %arg7[%c0_20, %c0_21] : memref<32x32xbf16, #tpu.memory_space<vmem>>, vector<32x32xbf16>
    %cst_22 = arith.constant dense<0.000000e+00> : vector<18x32xf32>
    %42 = tpu.matmul %37, %41, %cst_22 {dimension_numbers = #tpu.dot_dimension_numbers<[1], [0], [0], [1], [0, 0, 1, 1], [], []>} : vector<18x32xbf16>, vector<32x32xbf16>, vector<18x32xf32> -> vector<18x32xf32>
    %43 = vector.shape_cast %42 : vector<18x32xf32> to vector<2x9x32xf32>
    %44 = vector.extract_strided_slice %36 {offsets = [0, 0, 0], sizes = [2, 1, 32], strides = [1, 1, 1]} : vector<2x9x32xbf16> to vector<2x1x32xbf16>
    %45 = vector.shape_cast %44 : vector<2x1x32xbf16> to vector<2x32xbf16>
    %c0_23 = arith.constant 0 : index
    %c0_24 = arith.constant 0 : index
    %46 = vector.load %arg5[%c0_23, %c0_24] : memref<32x32xbf16, #tpu.memory_space<vmem>>, vector<32x32xbf16>
    %cst_25 = arith.constant dense<0.000000e+00> : vector<2x32xf32>
    %47 = tpu.matmul %45, %46, %cst_25 {dimension_numbers = #tpu.dot_dimension_numbers<[1], [0], [0], [1], [0, 0, 1, 1], [], []>} : vector<2x32xbf16>, vector<32x32xbf16>, vector<2x32xf32> -> vector<2x32xf32>
    %cst_26 = arith.constant 2.500000e-01 : f32
    %48 = vector.broadcast %cst_26 : f32 to vector<2x32xf32>
    %49 = arith.mulf %47, %48 : vector<2x32xf32>
    %50 = tpu.iota {dimensions = array<i32: 0>} : vector<32x2xi32>
    %51 = tpu.iota {dimensions = array<i32: 1>} : vector<32x2xi32>
    %c16_i32 = arith.constant 16 : i32
    %52 = vector.broadcast %c16_i32 : i32 to vector<32x2xi32>
    %53 = arith.muli %51, %52 : vector<32x2xi32>
    %54 = arith.cmpi sge, %50, %53 : vector<32x2xi32>
    %c1_i32 = arith.constant 1 : i32
    %55 = vector.broadcast %c1_i32 : i32 to vector<32x2xi32>
    %56 = arith.addi %51, %55 : vector<32x2xi32>
    %c16_i32_27 = arith.constant 16 : i32
    %57 = vector.broadcast %c16_i32_27 : i32 to vector<32x2xi32>
    %58 = arith.muli %56, %57 : vector<32x2xi32>
    %59 = arith.cmpi slt, %50, %58 : vector<32x2xi32>
    %60 = arith.andi %54, %59 : vector<32x2xi1>
    %61 = arith.extui %60 : vector<32x2xi1> to vector<32x2xi32>
    %62 = arith.sitofp %61 : vector<32x2xi32> to vector<32x2xf32>
    %63 = tpu.iota {dimensions = array<i32: 0>} : vector<2x32xi32>
    %64 = tpu.iota {dimensions = array<i32: 1>} : vector<2x32xi32>
    %c16_i32_28 = arith.constant 16 : i32
    %65 = vector.broadcast %c16_i32_28 : i32 to vector<2x32xi32>
    %66 = arith.muli %63, %65 : vector<2x32xi32>
    %67 = arith.cmpi sge, %64, %66 : vector<2x32xi32>
    %c1_i32_29 = arith.constant 1 : i32
    %68 = vector.broadcast %c1_i32_29 : i32 to vector<2x32xi32>
    %69 = arith.addi %63, %68 : vector<2x32xi32>
    %c16_i32_30 = arith.constant 16 : i32
    %70 = vector.broadcast %c16_i32_30 : i32 to vector<2x32xi32>
    %71 = arith.muli %69, %70 : vector<2x32xi32>
    %72 = arith.cmpi slt, %64, %71 : vector<2x32xi32>
    %73 = arith.andi %67, %72 : vector<2x32xi1>
    %74 = arith.extui %73 : vector<2x32xi1> to vector<2x32xi32>
    %75 = arith.sitofp %74 : vector<2x32xi32> to vector<2x32xf32>
    %76 = vector.shape_cast %49 : vector<2x32xf32> to vector<2x1x32xf32>
    %77 = vector.broadcast %76 : vector<2x1x32xf32> to vector<2x9x32xf32>
    %78 = arith.mulf %77, %40 : vector<2x9x32xf32>
    %79 = vector.shape_cast %78 : vector<2x9x32xf32> to vector<18x32xf32>
    %cst_31 = arith.constant dense<0.000000e+00> : vector<18x2xf32>
    %80 = tpu.matmul %79, %62, %cst_31 {dimension_numbers = #tpu.dot_dimension_numbers<[1], [0], [0], [1], [0, 0, 1, 1], [], []>} : vector<18x32xf32>, vector<32x2xf32>, vector<18x2xf32> -> vector<18x2xf32>
    %81 = vector.shape_cast %80 : vector<18x2xf32> to vector<2x9x2xf32>
    %cst_32 = arith.constant dense<0xFF800000> : vector<2x2xf32>
    %82 = vector.multi_reduction <maximumf>, %81, %cst_32 [1] : vector<2x9x2xf32> to vector<2x2xf32>
    %83 = vector.shape_cast %82 : vector<2x2xf32> to vector<2x1x2xf32>
    %84 = vector.broadcast %83 : vector<2x1x2xf32> to vector<2x9x2xf32>
    %85 = arith.subf %81, %84 : vector<2x9x2xf32>
    %86 = math.exp %85 : vector<2x9x2xf32>
    %cst_33 = arith.constant dense<0.000000e+00> : vector<2x2xf32>
    %87 = vector.multi_reduction <add>, %86, %cst_33 [1] : vector<2x9x2xf32> to vector<2x2xf32>
    %88 = vector.shape_cast %87 : vector<2x2xf32> to vector<2x1x2xf32>
    %89 = tpu.reciprocal %88 {approx = true} : vector<2x1x2xf32> -> vector<2x1x2xf32>
    %90 = vector.broadcast %89 : vector<2x1x2xf32> to vector<2x9x2xf32>
    %91 = arith.mulf %86, %90 : vector<2x9x2xf32>
    %92 = vector.shape_cast %91 : vector<2x9x2xf32> to vector<18x2xf32>
    %cst_34 = arith.constant dense<0.000000e+00> : vector<18x32xf32>
    %93 = tpu.matmul %92, %75, %cst_34 {dimension_numbers = #tpu.dot_dimension_numbers<[1], [0], [0], [1], [0, 0, 1, 1], [], []>} : vector<18x2xf32>, vector<2x32xf32>, vector<18x32xf32> -> vector<18x32xf32>
    %94 = vector.shape_cast %93 : vector<18x32xf32> to vector<2x9x32xf32>
    %95 = arith.mulf %94, %43 : vector<2x9x32xf32>
    %cst_35 = arith.constant dense<0.000000e+00> : vector<2x32xf32>
    %96 = vector.multi_reduction <add>, %95, %cst_35 [1] : vector<2x9x32xf32> to vector<2x32xf32>
    %97 = arith.truncf %96 : vector<2x32xf32> to vector<2x32xbf16>
    %c0_36 = arith.constant 0 : index
    %c0_37 = arith.constant 0 : index
    %98 = vector.load %arg8[%c0_36, %c0_37] : memref<32x32xbf16, #tpu.memory_space<vmem>>, vector<32x32xbf16>
    %cst_38 = arith.constant dense<0.000000e+00> : vector<2x32xf32>
    %99 = tpu.matmul %97, %98, %cst_38 {dimension_numbers = #tpu.dot_dimension_numbers<[1], [0], [0], [1], [0, 0, 1, 1], [], []>} : vector<2x32xbf16>, vector<32x32xbf16>, vector<2x32xf32> -> vector<2x32xf32>
    %100 = vector.broadcast %8 : vector<1x32xf32> to vector<2x32xf32>
    %101 = arith.addf %99, %100 : vector<2x32xf32>
    %102 = vector.broadcast %6 : vector<1x32xf32> to vector<2x32xf32>
    %103 = arith.mulf %102, %101 : vector<2x32xf32>
    %104 = arith.addf %1, %103 : vector<2x32xf32>
    %cst_39 = arith.constant dense<0.000000e+00> : vector<2xf32>
    %105 = vector.multi_reduction <add>, %104, %cst_39 [1] : vector<2x32xf32> to vector<2xf32>
    %106 = vector.shape_cast %105 : vector<2xf32> to vector<2x1xf32>
    %cst_40 = arith.constant 3.200000e+01 : f32
    %107 = vector.broadcast %cst_40 : f32 to vector<2x1xf32>
    %108 = arith.divf %106, %107 : vector<2x1xf32>
    %109 = vector.broadcast %108 : vector<2x1xf32> to vector<2x32xf32>
    %110 = arith.subf %104, %109 : vector<2x32xf32>
    %111 = arith.mulf %110, %110 : vector<2x32xf32>
    %cst_41 = arith.constant dense<0.000000e+00> : vector<2xf32>
    %112 = vector.multi_reduction <add>, %111, %cst_41 [1] : vector<2x32xf32> to vector<2xf32>
    %113 = vector.shape_cast %112 : vector<2xf32> to vector<2x1xf32>
    %cst_42 = arith.constant 3.200000e+01 : f32
    %114 = vector.broadcast %cst_42 : f32 to vector<2x1xf32>
    %115 = arith.divf %113, %114 : vector<2x1xf32>
    %116 = vector.broadcast %108 : vector<2x1xf32> to vector<2x32xf32>
    %117 = arith.subf %104, %116 : vector<2x32xf32>
    %cst_43 = arith.constant 9.99999974E-6 : f32
    %118 = vector.broadcast %cst_43 : f32 to vector<2x1xf32>
    %119 = arith.addf %115, %118 : vector<2x1xf32>
    %120 = math.rsqrt %119 : vector<2x1xf32>
    %121 = vector.broadcast %120 : vector<2x1xf32> to vector<2x32xf32>
    %122 = arith.mulf %117, %121 : vector<2x32xf32>
    %123 = vector.broadcast %4 : vector<1x32xf32> to vector<2x32xf32>
    %124 = arith.mulf %122, %123 : vector<2x32xf32>
    %125 = vector.broadcast %5 : vector<1x32xf32> to vector<2x32xf32>
    %126 = arith.addf %124, %125 : vector<2x32xf32>
    %127 = arith.truncf %126 : vector<2x32xf32> to vector<2x32xbf16>
    %c0_44 = arith.constant 0 : index
    %c0_45 = arith.constant 0 : index
    %128 = vector.load %arg9[%c0_44, %c0_45] : memref<32x128xbf16, #tpu.memory_space<vmem>>, vector<32x128xbf16>
    %cst_46 = arith.constant dense<0.000000e+00> : vector<2x128xf32>
    %129 = tpu.matmul %127, %128, %cst_46 {dimension_numbers = #tpu.dot_dimension_numbers<[1], [0], [0], [1], [0, 0, 1, 1], [], []>} : vector<2x32xbf16>, vector<32x128xbf16>, vector<2x128xf32> -> vector<2x128xf32>
    %c0_47 = arith.constant 0 : index
    %c0_48 = arith.constant 0 : index
    %130 = vector.load %arg4[%c0_47, %c0_48] : memref<1x128xf32, #tpu.memory_space<vmem>>, vector<1x128xf32>
    %131 = vector.broadcast %130 : vector<1x128xf32> to vector<2x128xf32>
    %132 = arith.addf %129, %131 : vector<2x128xf32>
    %cst_49 = arith.constant 5.000000e-01 : f32
    %133 = vector.broadcast %cst_49 : f32 to vector<2x128xf32>
    %134 = arith.mulf %133, %132 : vector<2x128xf32>
    %cst_50 = arith.constant 0.707106769 : f32
    %135 = vector.broadcast %cst_50 : f32 to vector<2x128xf32>
    %136 = arith.mulf %132, %135 : vector<2x128xf32>
    %cst_51 = arith.constant 0.000000e+00 : f32
    %137 = vector.broadcast %cst_51 : f32 to vector<2x128xf32>
    %138 = arith.cmpf oge, %136, %137 : vector<2x128xf32>
    %cst_52 = arith.constant 1.000000e+00 : f32
    %cst_53 = arith.constant -1.000000e+00 : f32
    %139 = vector.broadcast %cst_52 : f32 to vector<2x128xf32>
    %140 = vector.broadcast %cst_53 : f32 to vector<2x128xf32>
    %141 = arith.select %138, %139, %140 : vector<2x128xi1>, vector<2x128xf32>
    %142 = math.absf %136 : vector<2x128xf32>
    %cst_54 = arith.constant 0.327591091 : f32
    %143 = vector.broadcast %cst_54 : f32 to vector<2x128xf32>
    %144 = arith.mulf %143, %142 : vector<2x128xf32>
    %cst_55 = arith.constant 1.000000e+00 : f32
    %145 = vector.broadcast %cst_55 : f32 to vector<2x128xf32>
    %146 = arith.addf %145, %144 : vector<2x128xf32>
    %cst_56 = arith.constant 1.000000e+00 : f32
    %147 = vector.broadcast %cst_56 : f32 to vector<2x128xf32>
    %148 = arith.divf %147, %146 : vector<2x128xf32>
    %cst_57 = arith.constant 1.06140542 : f32
    %149 = vector.broadcast %cst_57 : f32 to vector<2x128xf32>
    %150 = arith.mulf %149, %148 : vector<2x128xf32>
    %cst_58 = arith.constant -1.45315206 : f32
    %151 = vector.broadcast %cst_58 : f32 to vector<2x128xf32>
    %152 = arith.addf %150, %151 : vector<2x128xf32>
    %153 = arith.mulf %152, %148 : vector<2x128xf32>
    %cst_59 = arith.constant 1.42141378 : f32
    %154 = vector.broadcast %cst_59 : f32 to vector<2x128xf32>
    %155 = arith.addf %153, %154 : vector<2x128xf32>
    %156 = arith.mulf %155, %148 : vector<2x128xf32>
    %cst_60 = arith.constant -0.284496725 : f32
    %157 = vector.broadcast %cst_60 : f32 to vector<2x128xf32>
    %158 = arith.addf %156, %157 : vector<2x128xf32>
    %159 = arith.mulf %158, %148 : vector<2x128xf32>
    %cst_61 = arith.constant 0.254829586 : f32
    %160 = vector.broadcast %cst_61 : f32 to vector<2x128xf32>
    %161 = arith.addf %159, %160 : vector<2x128xf32>
    %162 = arith.mulf %161, %148 : vector<2x128xf32>
    %cst_62 = arith.constant 0.000000e+00 : f32
    %163 = vector.broadcast %cst_62 : f32 to vector<2x128xf32>
    %164 = arith.subf %163, %142 : vector<2x128xf32>
    %165 = arith.mulf %164, %142 : vector<2x128xf32>
    %166 = math.exp %165 : vector<2x128xf32>
    %167 = arith.mulf %162, %166 : vector<2x128xf32>
    %cst_63 = arith.constant 1.000000e+00 : f32
    %168 = vector.broadcast %cst_63 : f32 to vector<2x128xf32>
    %169 = arith.subf %168, %167 : vector<2x128xf32>
    %170 = arith.mulf %141, %169 : vector<2x128xf32>
    %cst_64 = arith.constant 1.000000e+00 : f32
    %171 = vector.broadcast %cst_64 : f32 to vector<2x128xf32>
    %172 = arith.addf %171, %170 : vector<2x128xf32>
    %173 = arith.mulf %134, %172 : vector<2x128xf32>
    %174 = arith.truncf %173 : vector<2x128xf32> to vector<2x128xbf16>
    %c0_65 = arith.constant 0 : index
    %c0_66 = arith.constant 0 : index
    %175 = vector.load %arg10[%c0_65, %c0_66] : memref<128x32xbf16, #tpu.memory_space<vmem>>, vector<128x32xbf16>
    %cst_67 = arith.constant dense<0.000000e+00> : vector<2x32xf32>
    %176 = tpu.matmul %174, %175, %cst_67 {dimension_numbers = #tpu.dot_dimension_numbers<[1], [0], [0], [1], [0, 0, 1, 1], [], []>} : vector<2x128xbf16>, vector<128x32xbf16>, vector<2x32xf32> -> vector<2x32xf32>
    %177 = vector.broadcast %9 : vector<1x32xf32> to vector<2x32xf32>
    %178 = arith.addf %176, %177 : vector<2x32xf32>
    %179 = vector.broadcast %7 : vector<1x32xf32> to vector<2x32xf32>
    %180 = arith.mulf %179, %178 : vector<2x32xf32>
    %181 = arith.addf %104, %180 : vector<2x32xf32>
    %c0_68 = arith.constant 0 : index
    %c0_69 = arith.constant 0 : index
    %182 = vector.load %arg11[%c0_68, %c0_69] : memref<2x32xf32, #tpu.memory_space<vmem>>, vector<2x32xf32>
    tpu.vector_store %arg11[%c0_68, %c0_69], %181 {strides = array<i32>} : memref<2x32xf32, #tpu.memory_space<vmem>>, vector<2x32xf32>,
    %183 = tpu.transpose %91, [0, 2, 1] : vector<2x9x2xf32> -> vector<2x2x9xf32>
    %cst_70 = arith.constant 0.000000e+00 : f32
    %184 = vector.broadcast %cst_70 : f32 to vector<2x2x119xf32>
    %185 = tpu.concatenate %183, %184 in 2 : vector<2x2x9xf32>, vector<2x2x119xf32> -> vector<2x2x128xf32>
    %c0_71 = arith.constant 0 : index
    %c0_72 = arith.constant 0 : index
    %c0_73 = arith.constant 0 : index
    %186 = vector.load %arg12[%c0_71, %c0_72, %c0_73] : memref<2x2x128xf32, #tpu.memory_space<vmem>>, vector<2x2x128xf32>
    tpu.vector_store %arg12[%c0_71, %c0_72, %c0_73], %185 {strides = array<i32>} : memref<2x2x128xf32, #tpu.memory_space<vmem>>, vector<2x2x128xf32>,
    return
  }
  func.func @transform_0(%arg0: i32) -> (i32, i32, i32) {
    %c0_i32 = arith.constant 0 : i32
    %c0_i32_0 = arith.constant 0 : i32
    %c0_i32_1 = arith.constant 0 : i32
    return %arg0, %c0_i32, %c0_i32_0 : i32, i32, i32
  }
  func.func @transform_1(%arg0: i32) -> (i32, i32) {
    %c0_i32 = arith.constant 0 : i32
    %c0_i32_0 = arith.constant 0 : i32
    return %arg0, %c0_i32 : i32, i32
  }
  func.func @transform_2(%arg0: i32) -> (i32, i32) {
    %c0_i32 = arith.constant 0 : i32
    %c0_i32_0 = arith.constant 0 : i32
    %c0_i32_1 = arith.constant 0 : i32
    return %c0_i32, %c0_i32_0 : i32, i32
  }
  func.func @transform_3(%arg0: i32) -> (i32, i32) {
    %c0_i32 = arith.constant 0 : i32
    %c0_i32_0 = arith.constant 0 : i32
    %c0_i32_1 = arith.constant 0 : i32
    return %c0_i32, %c0_i32_0 : i32, i32
  }
  func.func @transform_4(%arg0: i32) -> (i32, i32) {
    %c0_i32 = arith.constant 0 : i32
    %c0_i32_0 = arith.constant 0 : i32
    %c0_i32_1 = arith.constant 0 : i32
    return %c0_i32, %c0_i32_0 : i32, i32
  }
  func.func @transform_5(%arg0: i32) -> (i32, i32) {
    %c0_i32 = arith.constant 0 : i32
    %c0_i32_0 = arith.constant 0 : i32
    %c0_i32_1 = arith.constant 0 : i32
    return %c0_i32, %c0_i32_0 : i32, i32
  }
  func.func @transform_6(%arg0: i32) -> (i32, i32) {
    %c0_i32 = arith.constant 0 : i32
    %c0_i32_0 = arith.constant 0 : i32
    %c0_i32_1 = arith.constant 0 : i32
    return %c0_i32, %c0_i32_0 : i32, i32
  }
  func.func @transform_7(%arg0: i32) -> (i32, i32) {
    %c0_i32 = arith.constant 0 : i32
    %c0_i32_0 = arith.constant 0 : i32
    %c0_i32_1 = arith.constant 0 : i32
    return %c0_i32, %c0_i32_0 : i32, i32
  }
  func.func @transform_8(%arg0: i32) -> (i32, i32) {
    %c0_i32 = arith.constant 0 : i32
    %c0_i32_0 = arith.constant 0 : i32
    %c0_i32_1 = arith.constant 0 : i32
    return %c0_i32, %c0_i32_0 : i32, i32
  }
  func.func @transform_9(%arg0: i32) -> (i32, i32) {
    %c0_i32 = arith.constant 0 : i32
    %c0_i32_0 = arith.constant 0 : i32
    %c0_i32_1 = arith.constant 0 : i32
    return %c0_i32, %c0_i32_0 : i32, i32
  }
  func.func @transform_10(%arg0: i32) -> (i32, i32) {
    %c0_i32 = arith.constant 0 : i32
    %c0_i32_0 = arith.constant 0 : i32
    return %arg0, %c0_i32 : i32, i32
  }
  func.func @transform_11(%arg0: i32) -> (i32, i32, i32) {
    %c0_i32 = arith.constant 0 : i32
    %c0_i32_0 = arith.constant 0 : i32
    %c0_i32_1 = arith.constant 0 : i32
    return %arg0, %c0_i32, %c0_i32_0 : i32, i32, i32
  }
}

</mosaic_0001>

<llo_original>
// kernel: tpu_custom_call.1
$region0: #{tpu_custom_call.1}
  #allocation0 [shape = 'u32[]', space=smem, size = 0x4, offset = 0x4, fixed_abs, tag = 'smem constant byte address 0x4 - core index']
  #allocation1 [shape = 'u32[72,128]{1,0:T(1,128)}', space=vmem, size = 0x9000, scoped, tag = 'internal scratch']
  %s0 = inlined_call_operand.vmem [shape: f32[2,8,32], index: 0, kind: input, shape index: {}]
  %s1 = inlined_call_operand.hbm [shape: f32[2,32], index: 1, kind: input, shape index: {}]
  %s2 = inlined_call_operand.hbm [shape: f32[8,32], index: 2, kind: input, shape index: {}]
  %s3 = inlined_call_operand.vmem [shape: f32[1,128], index: 3, kind: input, shape index: {}]
  %s4 = inlined_call_operand.vmem [shape: bf16[32,32], index: 4, kind: input, shape index: {}]
  %s5 = inlined_call_operand.vmem [shape: bf16[32,32], index: 5, kind: input, shape index: {}]
  %s6 = inlined_call_operand.vmem [shape: bf16[32,32], index: 6, kind: input, shape index: {}]
  %s7 = inlined_call_operand.vmem [shape: bf16[32,32], index: 7, kind: input, shape index: {}]
  %s8 = inlined_call_operand.hbm [shape: bf16[32,128], index: 8, kind: input, shape index: {}]
  %s9 = inlined_call_operand.vmem [shape: bf16[128,32], index: 9, kind: input, shape index: {}]
  %s10 = inlined_call_operand.hbm [shape: f32[2,32], index: 10, kind: output, shape index: {0}]
  %s11 = inlined_call_operand.hbm [shape: f32[2,2,128], index: 11, kind: output, shape index: {1}]
  %12 = xla_tuple %s10, %s11
  %s13 = sld [smem:[#allocation0]]
  $region70: #{tpu_custom_call.1} parent=0
    _
  %s15 = ssub.s32 1, %s13
  %s16 = scalar_select 0, %s15, %s13
  $region1: #{tpu_custom_call.1} parent=0
    #allocation2 [shape = 'u8[1024]{0}', space=vmem, size = 0x400, scoped, tag = 'input window, operand 1, single buffered']
    #allocation3 [shape = 's32[1]{0}', space=sflag, size = 0x4, scoped, tag = 'scoped memory for tpu_custom_call.1']
    #allocation4 [shape = 's32[1]{0}', space=sflag, size = 0x4, scoped, tag = 'scoped memory for tpu_custom_call.1']
    #allocation5 [shape = 'u8[4096]{0}', space=vmem, size = 0x1000, scoped, tag = 'input window, operand 2, single buffered']
    #allocation6 [shape = 's32[1]{0}', space=sflag, size = 0x4, scoped, tag = 'scoped memory for tpu_custom_call.1']
    #allocation7 [shape = 'u8[8192]{0}', space=vmem, size = 0x2000, scoped, tag = 'input window, operand 8, single buffered']
    #allocation8 [shape = 'u8[1024]{0}', space=vmem, size = 0x400, scoped, tag = 'output window, operand 0, single buffered']
    #allocation9 [shape = 'u8[2048]{0}', space=vmem, size = 0x800, scoped, tag = 'output window, operand 1, single buffered']
    #allocation10 [shape = 's32[1]{0}', space=sflag, size = 0x4, scoped, tag = 'scoped memory for tpu_custom_call.1']
    %17 = vsyncpa [#allocation3], 0
    %18 = vsyncpa [#allocation6], 0
    %19 = vsyncpa [#allocation4], 0
    %20 = vsyncpa [#allocation10], 0
    // Predicated region
    $region2: #{tpu_custom_call.1} parent=1 // pred_check
      _
    $region3: #{tpu_custom_call.1} parent=1 // pred_check_branch
      %22 = sbr.rel (0) target = $region5
    $region4: #{tpu_custom_call.1} parent=1 // pred_region
      _
    $region5: #{tpu_custom_call.1} parent=1 // pred_fallthru
      _
    // Predicated region
    $region6: #{tpu_custom_call.1} parent=1 // pred_check
      _
    $region7: #{tpu_custom_call.1} parent=1 // pred_check_branch
      %24 = sbr.rel (0) target = $region9
    $region8: #{tpu_custom_call.1} parent=1 // pred_region
      %26 = vsyncadd [#allocation3], 0
      %s28 = sshll.u32 %s1, 4
      %s29 = int_to_ptr.hbm [resolvable:$true] %s28
      %s30 = sshll.u32 [#allocation2], 4
      %s31 = int_to_ptr.vmem [resolvable:$true] %s30
      %33 = dma.hbm_to_vmem [thread:$0]  %s29, 32, %s31, [#allocation3]
    $region9: #{tpu_custom_call.1} parent=1 // pred_fallthru
      _
    // Predicated region
    $region10: #{tpu_custom_call.1} parent=1 // pred_check
      _
    $region11: #{tpu_custom_call.1} parent=1 // pred_check_branch
      %35 = sbr.rel (0) target = $region13
    $region12: #{tpu_custom_call.1} parent=1 // pred_region
      %37 = vsyncadd [#allocation6], 0
      %s39 = sshll.u32 %s2, 4
      %s40 = int_to_ptr.hbm [resolvable:$true] %s39
      %s41 = sshll.u32 [#allocation5], 4
      %s42 = int_to_ptr.vmem [resolvable:$true] %s41
      %44 = dma.hbm_to_vmem [thread:$0]  %s40, 128, %s42, [#allocation6]
    $region13: #{tpu_custom_call.1} parent=1 // pred_fallthru
      _
    // Predicated region
    $region14: #{tpu_custom_call.1} parent=1 // pred_check
      _
    $region15: #{tpu_custom_call.1} parent=1 // pred_check_branch
      %46 = sbr.rel (0) target = $region17
    $region16: #{tpu_custom_call.1} parent=1 // pred_region
      _
    $region17: #{tpu_custom_call.1} parent=1 // pred_fallthru
      _
    // Predicated region
    $region18: #{tpu_custom_call.1} parent=1 // pred_check
      _
    $region19: #{tpu_custom_call.1} parent=1 // pred_check_branch
      %48 = sbr.rel (0) target = $region21
    $region20: #{tpu_custom_call.1} parent=1 // pred_region
      _
    $region21: #{tpu_custom_call.1} parent=1 // pred_fallthru
      _
    // Predicated region
    $region22: #{tpu_custom_call.1} parent=1 // pred_check
      _
    $region23: #{tpu_custom_call.1} parent=1 // pred_check_branch
      %50 = sbr.rel (0) target = $region25
    $region24: #{tpu_custom_call.1} parent=1 // pred_region
      _
    $region25: #{tpu_custom_call.1} parent=1 // pred_fallthru
      _
    // Predicated region
    $region26: #{tpu_custom_call.1} parent=1 // pred_check
      _
    $region27: #{tpu_custom_call.1} parent=1 // pred_check_branch
      %52 = sbr.rel (0) target = $region29
    $region28: #{tpu_custom_call.1} parent=1 // pred_region
      _
    $region29: #{tpu_custom_call.1} parent=1 // pred_fallthru
      _
    // Predicated region
    $region30: #{tpu_custom_call.1} parent=1 // pred_check
      _
    $region31: #{tpu_custom_call.1} parent=1 // pred_check_branch
      %54 = sbr.rel (0) target = $region33
    $region32: #{tpu_custom_call.1} parent=1 // pred_region
      _
    $region33: #{tpu_custom_call.1} parent=1 // pred_fallthru
      _
    // Predicated region
    $region34: #{tpu_custom_call.1} parent=1 // pred_check
      _
    $region35: #{tpu_custom_call.1} parent=1 // pred_check_branch
      %56 = sbr.rel (0) target = $region37
    $region36: #{tpu_custom_call.1} parent=1 // pred_region
      %58 = vsyncadd [#allocation6], 0
      %s59 = sshll.u32 %s8, 4
      %s60 = int_to_ptr.hbm [resolvable:$true] %s59
      %s61 = sshll.u32 [#allocation7], 4
      %s62 = int_to_ptr.vmem [resolvable:$true] %s61
      %67 = dma.hbm_to_vmem [thread:$0]  %s60, 256, %s62, [#allocation6], 64, 64, 4
    $region37: #{tpu_custom_call.1} parent=1 // pred_fallthru
      _
    // Predicated region
    $region38: #{tpu_custom_call.1} parent=1 // pred_check
      _
    $region39: #{tpu_custom_call.1} parent=1 // pred_check_branch
      %69 = sbr.rel (0) target = $region41
    $region40: #{tpu_custom_call.1} parent=1 // pred_region
      _
    $region41: #{tpu_custom_call.1} parent=1 // pred_fallthru
      _
    // Predicated region
    $region42: #{tpu_custom_call.1} parent=1 // pred_check
      _
    $region43: #{tpu_custom_call.1} parent=1 // pred_check_branch
      %71 = sbr.rel (0) target = $region45
    $region44: #{tpu_custom_call.1} parent=1 // pred_region
      %73 = dma.done [#allocation3], 32
    $region45: #{tpu_custom_call.1} parent=1 // pred_fallthru
      _
    // Predicated region
    $region46: #{tpu_custom_call.1} parent=1 // pred_check
      _
    $region47: #{tpu_custom_call.1} parent=1 // pred_check_branch
      %75 = sbr.rel (0) target = $region49
    $region48: #{tpu_custom_call.1} parent=1 // pred_region
      %77 = dma.done [#allocation6], 128
    $region49: #{tpu_custom_call.1} parent=1 // pred_fallthru
      _
    // Predicated region
    $region50: #{tpu_custom_call.1} parent=1 // pred_check
      _
    $region51: #{tpu_custom_call.1} parent=1 // pred_check_branch
      %79 = sbr.rel (0) target = $region53
    $region52: #{tpu_custom_call.1} parent=1 // pred_region
      %81 = dma.done [#allocation6], 256
    $region53: #{tpu_custom_call.1} parent=1 // pred_fallthru
      _
    %v83 = vld [vmem:[%s0] sm:$0xff]
    %v84 = vld [vmem:[%s0 + $0x8] sm:$0xff]
    %v85 = vld [vmem:[#allocation2] sm:$0x3]
    %v86 = vld [vmem:[#allocation5] sm:$0x1]
    %v87 = vld [vmem:[#allocation5 + $0x1] sm:$0x1]
    %v88 = vld [vmem:[#allocation5 + $0x2] sm:$0x1]
    %v89 = vld [vmem:[#allocation5 + $0x3] sm:$0x1]
    %v90 = vld [vmem:[#allocation5 + $0x4] sm:$0x1]
    %v91 = vld [vmem:[#allocation5 + $0x5] sm:$0x1]
    %v92 = vld [vmem:[#allocation5 + $0x6] sm:$0x1]
    %v93 = vld [vmem:[#allocation5 + $0x7] sm:$0x1]
    %v95 = vrot.slane %v85, 1
    %v99 = vrot.slane %v83, 7
    %v100 = vrot.slane %v84, 7
    %vm103 = vcmask 1040384
    %v104 = vsel %vm103, %v85, %v99
    %v105 = vsel %vm103, %v95, %v100
    %vm106 = vcmask 261120
    %v107 = vsel %vm106, %v104, 0.0
    %108 = vadd.xlane.f32.xlu0 %v107
    %v109 = vpop.xlane.xlu0 %108
    %vm110 = vcmask 253952
    %v111 = vsel %vm110, %v99, 0.0
    %112 = vadd.xlane.f32.xlu0 %v111
    %v113 = vpop.xlane.xlu0 %112
    %v114 = vsel %vm106, %v105, 0.0
    %115 = vadd.xlane.f32.xlu0 %v114
    %v116 = vpop.xlane.xlu0 %115
    %v117 = vsel %vm110, %v100, 0.0
    %118 = vadd.xlane.f32.xlu0 %v117
    %v119 = vpop.xlane.xlu0 %118
    %v120 = vrcp.pop 32.0
    %v121 = vmul.f32 32.0, %v120
    %v122 = vsub.f32 1.0, %v121
    %v123 = vmul.f32 %v120, %v122
    %v124 = vadd.f32 %v120, %v123
    %vm125 = vweird.f32 %v120
    %v126 = vsel %vm125, %v120, %v124
    %v127 = vmul.f32 %v109, %v126
    %v128 = vmul.f32 %v113, %v126
    %v129 = vmul.f32 %v116, %v126
    %v130 = vmul.f32 %v119, %v126
    %v131 = vsub.f32 %v104, %v127
    %v132 = vsub.f32 %v99, %v128
    %v133 = vsub.f32 %v105, %v129
    %v134 = vsub.f32 %v100, %v130
    %v135 = vmul.f32 %v131, %v131
    %v136 = vmul.f32 %v132, %v132
    %v137 = vmul.f32 %v133, %v133
    %v138 = vmul.f32 %v134, %v134
    %v139 = vsel %vm106, %v135, 0.0
    %140 = vadd.xlane.f32.xlu0 %v139
    %v141 = vpop.xlane.xlu0 %140
    %v142 = vsel %vm110, %v136, 0.0
    %143 = vadd.xlane.f32.xlu0 %v142
    %v144 = vpop.xlane.xlu0 %143
    %v145 = vsel %vm106, %v137, 0.0
    %146 = vadd.xlane.f32.xlu0 %v145
    %v147 = vpop.xlane.xlu0 %146
    %v148 = vsel %vm110, %v138, 0.0
    %149 = vadd.xlane.f32.xlu0 %v148
    %v150 = vpop.xlane.xlu0 %149
    %v151 = vmul.f32 %v141, %v126
    %v152 = vmul.f32 %v144, %v126
    %v153 = vmul.f32 %v147, %v126
    %v154 = vmul.f32 %v150, %v126
    %v155 = vadd.f32 %v151, 1e-05
    %v156 = vadd.f32 %v152, 1e-05
    %v157 = vadd.f32 %v153, 1e-05
    %v158 = vadd.f32 %v154, 1e-05
    %v159 = vrsqrt.pop %v155
    %v160 = vmul.f32 %v159, %v155
    %v161 = vmul.f32 %v160, %v159
    %v162 = vmul.f32 0.5, %v161
    %v163 = vsub.f32 1.5, %v162
    %v164 = vmul.f32 %v159, %v163
    %vm165 = vweird.f32 %v155
    %vm166 = vweird.f32 %v159
    %vm167 = vmor %vm165, %vm166
    %v168 = vsel %vm167, %v159, %v164
    %v169 = vrsqrt.pop %v156
    %v170 = vmul.f32 %v169, %v156
    %v171 = vmul.f32 %v170, %v169
    %v172 = vmul.f32 0.5, %v171
    %v173 = vsub.f32 1.5, %v172
    %v174 = vmul.f32 %v169, %v173
    %vm175 = vweird.f32 %v156
    %vm176 = vweird.f32 %v169
    %vm177 = vmor %vm175, %vm176
    %v178 = vsel %vm177, %v169, %v174
    %v179 = vrsqrt.pop %v157
    %v180 = vmul.f32 %v179, %v157
    %v181 = vmul.f32 %v180, %v179
    %v182 = vmul.f32 0.5, %v181
    %v183 = vsub.f32 1.5, %v182
    %v184 = vmul.f32 %v179, %v183
    %vm185 = vweird.f32 %v157
    %vm186 = vweird.f32 %v179
    %vm187 = vmor %vm185, %vm186
    %v188 = vsel %vm187, %v179, %v184
    %v189 = vrsqrt.pop %v158
    %v190 = vmul.f32 %v189, %v158
    %v191 = vmul.f32 %v190, %v189
    %v192 = vmul.f32 0.5, %v191
    %v193 = vsub.f32 1.5, %v192
    %v194 = vmul.f32 %v189, %v193
    %vm195 = vweird.f32 %v158
    %vm196 = vweird.f32 %v189
    %vm197 = vmor %vm195, %vm196
    %v198 = vsel %vm197, %v189, %v194
    %v199 = vmul.f32 %v131, %v168
    %v200 = vmul.f32 %v132, %v178
    %v201 = vmul.f32 %v133, %v188
    %v202 = vmul.f32 %v134, %v198
    %v203 = vperm.slane %v86, 0
    %v204 = vmul.f32 %v199, %v203
    %v205 = vmul.f32 %v200, %v203
    %v206 = vmul.f32 %v201, %v203
    %v207 = vmul.f32 %v202, %v203
    %v208 = vperm.slane %v87, 0
    %v209 = vadd.f32 %v204, %v208
    %v210 = vadd.f32 %v205, %v208
    %v211 = vadd.f32 %v206, %v208
    %v212 = vadd.f32 %v207, %v208
    %v213 = vpack.c.bf16 %v209, %v209
    %v214 = vpack.c.bf16 %v210, %v210
    %v215 = vpack.c.bf16 %v211, %v211
    %v216 = vpack.c.bf16 %v212, %v212
    %v221 = vrot.slane %v213, 3
    %v222 = vrot.slane %v214, 3
    %v223 = vrot.slane %v215, 3
    %v224 = vrot.slane %v216, 3
    %v227 = vsel %vm103, %v213, %v221
    %vm229 = vcmask 1041409
    %v230 = vsel %vm229, %v213, %v221
    %v232 = vrot.slane %v230, 1
    %vm233 = vcmask 1042434
    %v234 = vsel %vm233, %v213, %v221
    %v236 = vrot.slane %v234, 2
    %vm237 = vcmask 1043459
    %v238 = vsel %vm237, %v213, %v221
    %v240 = vrot.slane %v238, 3
    %v243 = vsel %vm103, %v214, %v222
    %v247 = vsel %vm103, %v215, %v223
    %v249 = vsel %vm229, %v215, %v223
    %v251 = vrot.slane %v249, 1
    %v252 = vsel %vm233, %v215, %v223
    %v254 = vrot.slane %v252, 2
    %v255 = vsel %vm237, %v215, %v223
    %v257 = vrot.slane %v255, 3
    %v260 = vsel %vm103, %v216, %v224
    %v262 = vunpack.i.l.s16 %v227
    %v263 = vunpack.i.h.s16 %v227
    %v264 = vunpack.i.l.s16 %v232
    %v265 = vunpack.i.h.s16 %v232
    %v266 = vunpack.i.l.s16 %v236
    %v267 = vunpack.i.h.s16 %v236
    %v268 = vunpack.i.l.s16 %v240
    %v269 = vunpack.i.h.s16 %v240
    %v270 = vunpack.i.l.s16 %v243
    %v271 = vunpack.i.l.s16 %v247
    %v272 = vunpack.i.h.s16 %v247
    %v273 = vunpack.i.l.s16 %v251
    %v274 = vunpack.i.h.s16 %v251
    %v275 = vunpack.i.l.s16 %v254
    %v276 = vunpack.i.h.s16 %v254
    %v277 = vunpack.i.l.s16 %v257
    %v278 = vunpack.i.h.s16 %v257
    %v279 = vunpack.i.l.s16 %v260
    %v280 = vld [vmem:[%s5] sm:$0xf]
    %v281 = vld [vmem:[%s5 + $0x4] sm:$0xf]
    %v282 = vld [vmem:[%s5 + $0x8] sm:$0xf]
    %v283 = vld [vmem:[%s5 + $0xc] sm:$0xf]
    %v284 = vpack.i.b16 %v263, %v262
    %v285 = vpack.i.b16 %v265, %v264
    %v286 = vpack.i.b16 %v267, %v266
    %v287 = vpack.i.b16 %v269, %v268
    %v288 = vpack.i.b16 %v271, %v270
    %v289 = vpack.i.b16 %v273, %v272
    %v290 = vpack.i.b16 %v275, %v274
    %v291 = vpack.i.b16 %v277, %v276
    %v292 = vpack.i.b16 %v279, %v278
    %294 = vst [vmem:[#allocation1] ss:$9 sm:$0xff] %v284
    %s296 = scalar_lea.vmem [#allocation1], 1
    %297 = vst [vmem:[%s296] ss:$9 sm:$0xff] %v285
    %s299 = scalar_lea.vmem [#allocation1], 2
    %300 = vst [vmem:[%s299] ss:$9 sm:$0xff] %v286
    %s302 = scalar_lea.vmem [#allocation1], 3
    %303 = vst [vmem:[%s302] ss:$9 sm:$0xff] %v287
    %s305 = scalar_lea.vmem [#allocation1], 4
    %306 = vst [vmem:[%s305] ss:$9 sm:$0xff] %v288
    %s308 = scalar_lea.vmem [#allocation1], 5
    %309 = vst [vmem:[%s308] ss:$9 sm:$0xff] %v289
    %s311 = scalar_lea.vmem [#allocation1], 6
    %312 = vst [vmem:[%s311] ss:$9 sm:$0xff] %v290
    %s314 = scalar_lea.vmem [#allocation1], 7
    %315 = vst [vmem:[%s314] ss:$9 sm:$0xff] %v291
    %v316 = vld [vmem:[#allocation1] sm:$0xff]
    %318 = vst [vmem:[#allocation1] ss:$9 sm:$0xff] %v292
    %v319 = vld [vmem:[#allocation1] sm:$0xff]
    %v324 = vunpack.c.l.b16 %v280
    %v325 = vunpack.c.l.b16 %v281
    %v326 = vunpack.c.l.b16 %v282
    %v327 = vunpack.c.l.b16 %v283
    %v328 = vpack.c.b16 %v325, %v324
    %v329 = vpack.c.b16 %v327, %v326
    %v332 = vsel %vm106, %v316, 0
    %v334 = vsel %vm106, %v319, 0
    %336 = vmatpush.bf16.msra.mxu0 0
    %337 = vmatpush.bf16.msra.mxu0 0
    %338 = vmatpush.bf16.msra.mxu0 0
    %339 = vmatpush.bf16.msra.mxu0 0
    %340 = vmatpush.bf16.msra.mxu0 0
    %341 = vmatpush.bf16.msra.mxu0 0
    %342 = vmatpush.bf16.msra.mxu0 %v329
    %343 = vmatpush.bf16.msra.mxu0 %v328
    %344 = vmatmul.bf16.gmra.mxu0 %v332
    %v345 = vpop.f32.mrf.mxu0
    %v346 = vadd.f32 0.0, %v345
    %v347 = vpop.f32.mrf.mxu0
    %v348 = vadd.f32 0.0, %v347
    %349 = vmatmul.bf16.gmra.mxu0 %v334
    %v350 = vpop.f32.mrf.mxu0
    %v351 = vadd.f32 0.0, %v350
    %v352 = vpop.f32.mrf.mxu0
    %353 = vdwg.mxu0
    %v357 = vrot.slane %v346, 1
    %v358 = vrot.slane %v346, 2
    %v359 = vrot.slane %v346, 3
    %v360 = vrot.slane %v346, 4
    %v361 = vrot.slane %v346, 5
    %v362 = vrot.slane %v346, 6
    %v363 = vrot.slane %v346, 7
    %v364 = vrot.slane %v348, 1
    %v365 = vrot.slane %v348, 2
    %v366 = vrot.slane %v348, 3
    %v367 = vrot.slane %v348, 4
    %v368 = vrot.slane %v348, 5
    %v369 = vrot.slane %v348, 6
    %v370 = vrot.slane %v348, 7
    %v371 = vrot.slane %v351, 1
    %v372 = vld [vmem:[%s6] sm:$0xf]
    %v373 = vld [vmem:[%s6 + $0x4] sm:$0xf]
    %v374 = vld [vmem:[%s6 + $0x8] sm:$0xf]
    %v375 = vld [vmem:[%s6 + $0xc] sm:$0xf]
    %376 = vst [vmem:[#allocation1] ss:$9 sm:$0xff] %v284
    %s377 = scalar_lea.vmem [#allocation1], 1
    %378 = vst [vmem:[%s377] ss:$9 sm:$0xff] %v285
    %s379 = scalar_lea.vmem [#allocation1], 2
    %380 = vst [vmem:[%s379] ss:$9 sm:$0xff] %v286
    %s381 = scalar_lea.vmem [#allocation1], 3
    %382 = vst [vmem:[%s381] ss:$9 sm:$0xff] %v287
    %s383 = scalar_lea.vmem [#allocation1], 4
    %384 = vst [vmem:[%s383] ss:$9 sm:$0xff] %v288
    %s385 = scalar_lea.vmem [#allocation1], 5
    %386 = vst [vmem:[%s385] ss:$9 sm:$0xff] %v289
    %s387 = scalar_lea.vmem [#allocation1], 6
    %388 = vst [vmem:[%s387] ss:$9 sm:$0xff] %v290
    %s389 = scalar_lea.vmem [#allocation1], 7
    %390 = vst [vmem:[%s389] ss:$9 sm:$0xff] %v291
    %v391 = vld [vmem:[#allocation1] sm:$0xff]
    %392 = vst [vmem:[#allocation1] ss:$9 sm:$0xff] %v292
    %v393 = vld [vmem:[#allocation1] sm:$0xff]
    %v398 = vunpack.c.l.b16 %v372
    %v399 = vunpack.c.l.b16 %v373
    %v400 = vunpack.c.l.b16 %v374
    %v401 = vunpack.c.l.b16 %v375
    %v402 = vpack.c.b16 %v399, %v398
    %v403 = vpack.c.b16 %v401, %v400
    %v406 = vsel %vm106, %v391, 0
    %v408 = vsel %vm106, %v393, 0
    %410 = vmatpush.bf16.msra.mxu0 0
    %411 = vmatpush.bf16.msra.mxu0 0
    %412 = vmatpush.bf16.msra.mxu0 0
    %413 = vmatpush.bf16.msra.mxu0 0
    %414 = vmatpush.bf16.msra.mxu0 0
    %415 = vmatpush.bf16.msra.mxu0 0
    %416 = vmatpush.bf16.msra.mxu0 %v403
    %417 = vmatpush.bf16.msra.mxu0 %v402
    %418 = vmatmul.bf16.gmra.mxu0 %v406
    %v419 = vpop.f32.mrf.mxu0
    %v420 = vadd.f32 0.0, %v419
    %v421 = vpop.f32.mrf.mxu0
    %v422 = vadd.f32 0.0, %v421
    %423 = vmatmul.bf16.gmra.mxu0 %v408
    %v424 = vpop.f32.mrf.mxu0
    %v425 = vadd.f32 0.0, %v424
    %v426 = vpop.f32.mrf.mxu0
    %427 = vdwg.mxu0
    %v431 = vrot.slane %v420, 1
    %v432 = vrot.slane %v420, 2
    %v433 = vrot.slane %v420, 3
    %v434 = vrot.slane %v420, 4
    %v435 = vrot.slane %v420, 5
    %v436 = vrot.slane %v420, 6
    %v437 = vrot.slane %v420, 7
    %v438 = vrot.slane %v422, 1
    %v439 = vrot.slane %v422, 2
    %v440 = vrot.slane %v422, 3
    %v441 = vrot.slane %v422, 4
    %v442 = vrot.slane %v422, 5
    %v443 = vrot.slane %v422, 6
    %v444 = vrot.slane %v422, 7
    %v445 = vrot.slane %v425, 1
    %v461 = vld [vmem:[%s4] sm:$0xf]
    %v462 = vld [vmem:[%s4 + $0x4] sm:$0xf]
    %v463 = vld [vmem:[%s4 + $0x8] sm:$0xf]
    %v464 = vld [vmem:[%s4 + $0xc] sm:$0xf]
    %v465 = vunpack.c.l.b16 %v213
    %v466 = vunpack.c.l.b16 %v215
    %v467 = vpack.c.b16 %v465, %v465
    %v468 = vpack.c.b16 %v466, %v466
    %v469 = vunpack.c.l.b16 %v467
    %v470 = vunpack.c.l.b16 %v468
    %v471 = vrot.slane %v470, 7
    %v472 = vsel %vm229, %v471, %v469
    %v473 = vpack.c.b16 %v472, %v472
    %v478 = vunpack.c.l.b16 %v461
    %v479 = vunpack.c.l.b16 %v462
    %v480 = vunpack.c.l.b16 %v463
    %v481 = vunpack.c.l.b16 %v464
    %v482 = vpack.c.b16 %v479, %v478
    %v483 = vpack.c.b16 %v481, %v480
    %v487 = vsel %vm106, %v473, 0
    %489 = vmatpush.bf16.msra.mxu0 0
    %490 = vmatpush.bf16.msra.mxu0 0
    %491 = vmatpush.bf16.msra.mxu0 0
    %492 = vmatpush.bf16.msra.mxu0 0
    %493 = vmatpush.bf16.msra.mxu0 0
    %494 = vmatpush.bf16.msra.mxu0 0
    %495 = vmatpush.bf16.msra.mxu0 %v483
    %496 = vmatpush.bf16.msra.mxu0 %v482
    %497 = vmatmul.bf16.gmra.mxu0 %v487
    %v498 = vpop.f32.mrf.mxu0
    %v499 = vadd.f32 0.0, %v498
    %v500 = vpop.f32.mrf.mxu0
    %501 = vdwg.mxu0
    %v502 = vmul.f32 %v499, 0.25
    %v503 = vlaneseq
    %v504 = vshrl.u32 %v503, 7
    %v505 = vadd.s32 %v504, 8
    %v506 = vadd.s32 %v504, 16
    %v507 = vadd.s32 %v504, 24
    %v508 = vlaneseq
    %v509 = vand.u32 %v508, 127
    %v510 = vmul.u32 %v509, 16
    %vm511 = vcmp.ge.s32.totalorder %v504, %v510
    %vm512 = vcmp.ge.s32.totalorder %v505, %v510
    %vm513 = vcmp.ge.s32.totalorder %v506, %v510
    %vm514 = vcmp.ge.s32.totalorder %v507, %v510
    %v515 = vadd.s32 %v509, 1
    %v516 = vmul.u32 %v515, 16
    %vm517 = vcmp.lt.s32.totalorder %v504, %v516
    %vm518 = vcmp.lt.s32.totalorder %v505, %v516
    %vm519 = vcmp.lt.s32.totalorder %v506, %v516
    %vm520 = vcmp.lt.s32.totalorder %v507, %v516
    %vm521 = vmand %vm511, %vm517
    %vm522 = vmand %vm512, %vm518
    %vm523 = vmand %vm513, %vm519
    %vm524 = vmand %vm514, %vm520
    %v525 = vsel %vm521, 1, 0
    %v526 = vsel %vm522, 1, 0
    %v527 = vsel %vm523, 1, 0
    %v528 = vsel %vm524, 1, 0
    %v529 = vcvt.s32.f32 %v525
    %v530 = vcvt.s32.f32 %v526
    %v531 = vcvt.s32.f32 %v527
    %v532 = vcvt.s32.f32 %v528
    %v533 = vmul.u32 %v504, 16
    %vm534 = vcmp.ge.s32.totalorder %v509, %v533
    %v535 = vadd.s32 %v504, 1
    %v536 = vmul.u32 %v535, 16
    %vm537 = vcmp.lt.s32.totalorder %v509, %v536
    %vm538 = vmand %vm534, %vm537
    %v539 = vsel %vm538, 1, 0
    %v540 = vcvt.s32.f32 %v539
    %v542 = vrot.slane %v502, 1
    %v543 = vperm.slane %v502, 0
    %v544 = vperm.slane %v542, 0
    %547 = vst [vmem:[#allocation1] ss:$9 sm:$0xff] %v346
    %s548 = scalar_lea.vmem [#allocation1], 1
    %549 = vst [vmem:[%s548] ss:$9 sm:$0xff] %v357
    %s550 = scalar_lea.vmem [#allocation1], 2
    %551 = vst [vmem:[%s550] ss:$9 sm:$0xff] %v358
    %s552 = scalar_lea.vmem [#allocation1], 3
    %553 = vst [vmem:[%s552] ss:$9 sm:$0xff] %v359
    %s554 = scalar_lea.vmem [#allocation1], 4
    %555 = vst [vmem:[%s554] ss:$9 sm:$0xff] %v360
    %s556 = scalar_lea.vmem [#allocation1], 5
    %557 = vst [vmem:[%s556] ss:$9 sm:$0xff] %v361
    %s558 = scalar_lea.vmem [#allocation1], 6
    %559 = vst [vmem:[%s558] ss:$9 sm:$0xff] %v362
    %s560 = scalar_lea.vmem [#allocation1], 7
    %561 = vst [vmem:[%s560] ss:$9 sm:$0xff] %v363
    %v562 = vld [vmem:[#allocation1] sm:$0xff]
    %563 = vst [vmem:[#allocation1] ss:$9 sm:$0xff] %v348
    %v564 = vld [vmem:[#allocation1] sm:$0xff]
    %565 = vst [vmem:[#allocation1] ss:$9 sm:$0xff] %v364
    %566 = vst [vmem:[%s548] ss:$9 sm:$0xff] %v365
    %567 = vst [vmem:[%s550] ss:$9 sm:$0xff] %v366
    %568 = vst [vmem:[%s552] ss:$9 sm:$0xff] %v367
    %569 = vst [vmem:[%s554] ss:$9 sm:$0xff] %v368
    %570 = vst [vmem:[%s556] ss:$9 sm:$0xff] %v369
    %571 = vst [vmem:[%s558] ss:$9 sm:$0xff] %v370
    %572 = vst [vmem:[%s560] ss:$9 sm:$0xff] %v351
    %v573 = vld [vmem:[#allocation1] sm:$0xff]
    %574 = vst [vmem:[#allocation1] ss:$9 sm:$0xff] %v371
    %v575 = vld [vmem:[#allocation1] sm:$0xff]
    %v580 = vmul.f32 %v543, %v562
    %v581 = vmul.f32 %v543, %v564
    %v582 = vmul.f32 %v544, %v573
    %v583 = vmul.f32 %v544, %v575
    %v588 = vrot.slane %v580, 1
    %v589 = vrot.slane %v580, 2
    %v590 = vrot.slane %v580, 3
    %v591 = vrot.slane %v580, 4
    %v592 = vrot.slane %v580, 5
    %v593 = vrot.slane %v580, 6
    %v594 = vrot.slane %v580, 7
    %v595 = vrot.slane %v582, 1
    %v596 = vrot.slane %v582, 2
    %v597 = vrot.slane %v582, 3
    %v598 = vrot.slane %v582, 4
    %v599 = vrot.slane %v582, 5
    %v600 = vrot.slane %v582, 6
    %v601 = vrot.slane %v582, 7
    %602 = vst [vmem:[#allocation1] ss:$9 sm:$0xff] %v580
    %s603 = scalar_lea.vmem [#allocation1], 1
    %604 = vst [vmem:[%s603] ss:$9 sm:$0xff] %v588
    %s605 = scalar_lea.vmem [#allocation1], 2
    %606 = vst [vmem:[%s605] ss:$9 sm:$0xff] %v589
    %s607 = scalar_lea.vmem [#allocation1], 3
    %608 = vst [vmem:[%s607] ss:$9 sm:$0xff] %v590
    %s609 = scalar_lea.vmem [#allocation1], 4
    %610 = vst [vmem:[%s609] ss:$9 sm:$0xff] %v591
    %s611 = scalar_lea.vmem [#allocation1], 5
    %612 = vst [vmem:[%s611] ss:$9 sm:$0xff] %v592
    %s613 = scalar_lea.vmem [#allocation1], 6
    %614 = vst [vmem:[%s613] ss:$9 sm:$0xff] %v593
    %s615 = scalar_lea.vmem [#allocation1], 7
    %616 = vst [vmem:[%s615] ss:$9 sm:$0xff] %v594
    %v617 = vld [vmem:[#allocation1] sm:$0xff]
    %618 = vst [vmem:[#allocation1] ss:$9 sm:$0xff] %v581
    %619 = vst [vmem:[%s603] ss:$9 sm:$0xff] %v582
    %620 = vst [vmem:[%s605] ss:$9 sm:$0xff] %v595
    %621 = vst [vmem:[%s607] ss:$9 sm:$0xff] %v596
    %622 = vst [vmem:[%s609] ss:$9 sm:$0xff] %v597
    %623 = vst [vmem:[%s611] ss:$9 sm:$0xff] %v598
    %624 = vst [vmem:[%s613] ss:$9 sm:$0xff] %v599
    %625 = vst [vmem:[%s615] ss:$9 sm:$0xff] %v600
    %v626 = vld [vmem:[#allocation1] sm:$0xff]
    %627 = vst [vmem:[#allocation1] ss:$9 sm:$0xff] %v601
    %628 = vst [vmem:[%s603] ss:$9 sm:$0xff] %v583
    %v629 = vld [vmem:[#allocation1] sm:$0xff]
    %v630 = vsel %vm106, %v617, 0
    %v632 = vsel %vm106, %v626, 0
    %v634 = vsel %vm106, %v629, 0
    %636 = vmatpush.msra.mxu0 0.0
    %637 = vmatpush.msra.mxu0 0.0
    %638 = vmatpush.msra.mxu0 0.0
    %639 = vmatpush.msra.mxu0 0.0
    %640 = vmatpush.msra.mxu0 0.0
    %641 = vmatpush.msra.mxu0 0.0
    %642 = vmatpush.msra.mxu0 0.0
    %643 = vmatpush.msra.mxu0 0.0
    %644 = vmatpush.msra.mxu0 0.0
    %645 = vmatpush.msra.mxu0 0.0
    %646 = vmatpush.msra.mxu0 0.0
    %647 = vmatpush.msra.mxu0 0.0
    %648 = vmatpush.msra.mxu0 %v532
    %649 = vmatpush.msra.mxu0 %v531
    %650 = vmatpush.msra.mxu0 %v530
    %651 = vmatpush.msra.mxu0 %v529
    %652 = vmatmul.f32.gmra.mxu0 %v630
    %v653 = vpop.f32.mrf.mxu0
    %v654 = vadd.f32 0.0, %v653
    %655 = vmatmul.f32.gmra.mxu0 %v632
    %v656 = vpop.f32.mrf.mxu0
    %v657 = vadd.f32 0.0, %v656
    %658 = vmatmul.f32.gmra.mxu0 %v634
    %v659 = vpop.f32.mrf.mxu0
    %v660 = vadd.f32 0.0, %v659
    %661 = vdwg.mxu0
    %v665 = vrot.slane %v654, 1
    %v666 = vrot.slane %v654, 2
    %v667 = vrot.slane %v654, 3
    %v668 = vrot.slane %v654, 4
    %v669 = vrot.slane %v654, 5
    %v670 = vrot.slane %v654, 6
    %v671 = vrot.slane %v654, 7
    %v672 = vrot.slane %v657, 1
    %v673 = vrot.slane %v657, 2
    %v674 = vrot.slane %v657, 3
    %v675 = vrot.slane %v657, 4
    %v676 = vrot.slane %v657, 5
    %v677 = vrot.slane %v657, 6
    %v678 = vrot.slane %v657, 7
    %v679 = vrot.slane %v660, 1
    %695 = vst [vmem:[#allocation1] ss:$9 sm:$0xff] %v654
    %s696 = scalar_lea.vmem [#allocation1], 1
    %697 = vst [vmem:[%s696] ss:$9 sm:$0xff] %v665
    %s698 = scalar_lea.vmem [#allocation1], 2
    %699 = vst [vmem:[%s698] ss:$9 sm:$0xff] %v666
    %s700 = scalar_lea.vmem [#allocation1], 3
    %701 = vst [vmem:[%s700] ss:$9 sm:$0xff] %v667
    %s702 = scalar_lea.vmem [#allocation1], 4
    %703 = vst [vmem:[%s702] ss:$9 sm:$0xff] %v668
    %s704 = scalar_lea.vmem [#allocation1], 5
    %705 = vst [vmem:[%s704] ss:$9 sm:$0xff] %v669
    %s706 = scalar_lea.vmem [#allocation1], 6
    %707 = vst [vmem:[%s706] ss:$9 sm:$0xff] %v670
    %s708 = scalar_lea.vmem [#allocation1], 7
    %709 = vst [vmem:[%s708] ss:$9 sm:$0xff] %v671
    %v710 = vld [vmem:[#allocation1] sm:$0xff]
    %711 = vst [vmem:[#allocation1] ss:$9 sm:$0xff] %v657
    %v712 = vld [vmem:[#allocation1] sm:$0xff]
    %713 = vst [vmem:[#allocation1] ss:$9 sm:$0xff] %v672
    %714 = vst [vmem:[%s696] ss:$9 sm:$0xff] %v673
    %715 = vst [vmem:[%s698] ss:$9 sm:$0xff] %v674
    %716 = vst [vmem:[%s700] ss:$9 sm:$0xff] %v675
    %717 = vst [vmem:[%s702] ss:$9 sm:$0xff] %v676
    %718 = vst [vmem:[%s704] ss:$9 sm:$0xff] %v677
    %719 = vst [vmem:[%s706] ss:$9 sm:$0xff] %v678
    %720 = vst [vmem:[%s708] ss:$9 sm:$0xff] %v660
    %v721 = vld [vmem:[#allocation1] sm:$0xff]
    %722 = vst [vmem:[#allocation1] ss:$9 sm:$0xff] %v679
    %v723 = vld [vmem:[#allocation1] sm:$0xff]
    %vm728 = vcmask 15360
    %v729 = vsel %vm728, %v710, -inf
    %vm730 = vcmask 8192
    %v731 = vsel %vm730, %v712, -inf
    %v732 = vmax.f32 %v729, %v731
    %v733 = vrot.slane %v732, 4
    %v734 = vmax.f32 %v732, %v733
    %v735 = vrot.slane %v734, 2
    %v736 = vmax.f32 %v734, %v735
    %v737 = vrot.slane %v736, 1
    %v738 = vmax.f32 %v736, %v737
    %v739 = vsel %vm728, %v721, -inf
    %v740 = vsel %vm730, %v723, -inf
    %v741 = vmax.f32 %v739, %v740
    %v742 = vrot.slane %v741, 4
    %v743 = vmax.f32 %v741, %v742
    %v744 = vrot.slane %v743, 2
    %v745 = vmax.f32 %v743, %v744
    %v746 = vrot.slane %v745, 1
    %v747 = vmax.f32 %v745, %v746
    %v750 = vrot.slane %v738, 1
    %v751 = vrot.slane %v738, 2
    %v752 = vrot.slane %v738, 3
    %v753 = vrot.slane %v738, 4
    %v754 = vrot.slane %v738, 5
    %v755 = vrot.slane %v738, 6
    %v756 = vrot.slane %v738, 7
    %v757 = vrot.slane %v747, 1
    %v758 = vrot.slane %v747, 2
    %v759 = vrot.slane %v747, 3
    %v760 = vrot.slane %v747, 4
    %v761 = vrot.slane %v747, 5
    %v762 = vrot.slane %v747, 6
    %v763 = vrot.slane %v747, 7
    %v778 = vsub.f32 %v654, %v738
    %v779 = vsub.f32 %v665, %v750
    %v780 = vsub.f32 %v666, %v751
    %v781 = vsub.f32 %v667, %v752
    %v782 = vsub.f32 %v668, %v753
    %v783 = vsub.f32 %v669, %v754
    %v784 = vsub.f32 %v670, %v755
    %v785 = vsub.f32 %v671, %v756
    %v786 = vsub.f32 %v657, %v738
    %v787 = vsub.f32 %v672, %v747
    %v788 = vsub.f32 %v673, %v757
    %v789 = vsub.f32 %v674, %v758
    %v790 = vsub.f32 %v675, %v759
    %v791 = vsub.f32 %v676, %v760
    %v792 = vsub.f32 %v677, %v761
    %v793 = vsub.f32 %v678, %v762
    %v794 = vsub.f32 %v660, %v763
    %v795 = vsub.f32 %v679, %v747
    %v796 = vmul.f32 %v778, 1.442695
    %v797 = vpow.pop %v796
    %v798 = vmul.f32 %v779, 1.442695
    %v799 = vpow.pop %v798
    %v800 = vmul.f32 %v780, 1.442695
    %v801 = vpow.pop %v800
    %v802 = vmul.f32 %v781, 1.442695
    %v803 = vpow.pop %v802
    %v804 = vmul.f32 %v782, 1.442695
    %v805 = vpow.pop %v804
    %v806 = vmul.f32 %v783, 1.442695
    %v807 = vpow.pop %v806
    %v808 = vmul.f32 %v784, 1.442695
    %v809 = vpow.pop %v808
    %v810 = vmul.f32 %v785, 1.442695
    %v811 = vpow.pop %v810
    %v812 = vmul.f32 %v786, 1.442695
    %v813 = vpow.pop %v812
    %v814 = vmul.f32 %v787, 1.442695
    %v815 = vpow.pop %v814
    %v816 = vmul.f32 %v788, 1.442695
    %v817 = vpow.pop %v816
    %v818 = vmul.f32 %v789, 1.442695
    %v819 = vpow.pop %v818
    %v820 = vmul.f32 %v790, 1.442695
    %v821 = vpow.pop %v820
    %v822 = vmul.f32 %v791, 1.442695
    %v823 = vpow.pop %v822
    %v824 = vmul.f32 %v792, 1.442695
    %v825 = vpow.pop %v824
    %v826 = vmul.f32 %v793, 1.442695
    %v827 = vpow.pop %v826
    %v828 = vmul.f32 %v794, 1.442695
    %v829 = vpow.pop %v828
    %v830 = vmul.f32 %v795, 1.442695
    %v831 = vpow.pop %v830
    %850 = vst [vmem:[#allocation1] ss:$9 sm:$0xff] %v797
    %s851 = scalar_lea.vmem [#allocation1], 1
    %852 = vst [vmem:[%s851] ss:$9 sm:$0xff] %v799
    %s853 = scalar_lea.vmem [#allocation1], 2
    %854 = vst [vmem:[%s853] ss:$9 sm:$0xff] %v801
    %s855 = scalar_lea.vmem [#allocation1], 3
    %856 = vst [vmem:[%s855] ss:$9 sm:$0xff] %v803
    %s857 = scalar_lea.vmem [#allocation1], 4
    %858 = vst [vmem:[%s857] ss:$9 sm:$0xff] %v805
    %s859 = scalar_lea.vmem [#allocation1], 5
    %860 = vst [vmem:[%s859] ss:$9 sm:$0xff] %v807
    %s861 = scalar_lea.vmem [#allocation1], 6
    %862 = vst [vmem:[%s861] ss:$9 sm:$0xff] %v809
    %s863 = scalar_lea.vmem [#allocation1], 7
    %864 = vst [vmem:[%s863] ss:$9 sm:$0xff] %v811
    %v865 = vld [vmem:[#allocation1] sm:$0xff]
    %866 = vst [vmem:[#allocation1] ss:$9 sm:$0xff] %v813
    %v867 = vld [vmem:[#allocation1] sm:$0xff]
    %868 = vst [vmem:[#allocation1] ss:$9 sm:$0xff] %v815
    %869 = vst [vmem:[%s851] ss:$9 sm:$0xff] %v817
    %870 = vst [vmem:[%s853] ss:$9 sm:$0xff] %v819
    %871 = vst [vmem:[%s855] ss:$9 sm:$0xff] %v821
    %872 = vst [vmem:[%s857] ss:$9 sm:$0xff] %v823
    %873 = vst [vmem:[%s859] ss:$9 sm:$0xff] %v825
    %874 = vst [vmem:[%s861] ss:$9 sm:$0xff] %v827
    %875 = vst [vmem:[%s863] ss:$9 sm:$0xff] %v829
    %v876 = vld [vmem:[#allocation1] sm:$0xff]
    %877 = vst [vmem:[#allocation1] ss:$9 sm:$0xff] %v831
    %v878 = vld [vmem:[#allocation1] sm:$0xff]
    %v883 = vsel %vm728, %v865, 0.0
    %v884 = vsel %vm730, %v867, 0.0
    %v885 = vadd.f32 %v883, %v884
    %v886 = vrot.slane %v885, 4
    %v887 = vadd.f32 %v885, %v886
    %v888 = vrot.slane %v887, 2
    %v889 = vadd.f32 %v887, %v888
    %v890 = vrot.slane %v889, 1
    %v891 = vadd.f32 %v889, %v890
    %v892 = vsel %vm728, %v876, 0.0
    %v893 = vsel %vm730, %v878, 0.0
    %v894 = vadd.f32 %v892, %v893
    %v895 = vrot.slane %v894, 4
    %v896 = vadd.f32 %v894, %v895
    %v897 = vrot.slane %v896, 2
    %v898 = vadd.f32 %v896, %v897
    %v899 = vrot.slane %v898, 1
    %v900 = vadd.f32 %v898, %v899
    %v901 = vrcp.pop %v891
    %v902 = vrcp.pop %v900
    %v905 = vrot.slane %v901, 1
    %v906 = vrot.slane %v901, 2
    %v907 = vrot.slane %v901, 3
    %v908 = vrot.slane %v901, 4
    %v909 = vrot.slane %v901, 5
    %v910 = vrot.slane %v901, 6
    %v911 = vrot.slane %v901, 7
    %v912 = vrot.slane %v902, 1
    %v913 = vrot.slane %v902, 2
    %v914 = vrot.slane %v902, 3
    %v915 = vrot.slane %v902, 4
    %v916 = vrot.slane %v902, 5
    %v917 = vrot.slane %v902, 6
    %v918 = vrot.slane %v902, 7
    %v933 = vmul.f32 %v797, %v901
    %v934 = vmul.f32 %v799, %v905
    %v935 = vmul.f32 %v801, %v906
    %v936 = vmul.f32 %v803, %v907
    %v937 = vmul.f32 %v805, %v908
    %v938 = vmul.f32 %v807, %v909
    %v939 = vmul.f32 %v809, %v910
    %v940 = vmul.f32 %v811, %v911
    %v941 = vmul.f32 %v813, %v901
    %v942 = vmul.f32 %v815, %v902
    %v943 = vmul.f32 %v817, %v912
    %v944 = vmul.f32 %v819, %v913
    %v945 = vmul.f32 %v821, %v914
    %v946 = vmul.f32 %v823, %v915
    %v947 = vmul.f32 %v825, %v916
    %v948 = vmul.f32 %v827, %v917
    %v949 = vmul.f32 %v829, %v918
    %v950 = vmul.f32 %v831, %v902
    %969 = vst [vmem:[#allocation1] ss:$9 sm:$0xff] %v933
    %s970 = scalar_lea.vmem [#allocation1], 1
    %971 = vst [vmem:[%s970] ss:$9 sm:$0xff] %v934
    %s972 = scalar_lea.vmem [#allocation1], 2
    %973 = vst [vmem:[%s972] ss:$9 sm:$0xff] %v935
    %s974 = scalar_lea.vmem [#allocation1], 3
    %975 = vst [vmem:[%s974] ss:$9 sm:$0xff] %v936
    %s976 = scalar_lea.vmem [#allocation1], 4
    %977 = vst [vmem:[%s976] ss:$9 sm:$0xff] %v937
    %s978 = scalar_lea.vmem [#allocation1], 5
    %979 = vst [vmem:[%s978] ss:$9 sm:$0xff] %v938
    %s980 = scalar_lea.vmem [#allocation1], 6
    %981 = vst [vmem:[%s980] ss:$9 sm:$0xff] %v939
    %s982 = scalar_lea.vmem [#allocation1], 7
    %983 = vst [vmem:[%s982] ss:$9 sm:$0xff] %v940
    %v984 = vld [vmem:[#allocation1] sm:$0xff]
    %985 = vst [vmem:[#allocation1] ss:$9 sm:$0xff] %v941
    %986 = vst [vmem:[%s970] ss:$9 sm:$0xff] %v942
    %987 = vst [vmem:[%s972] ss:$9 sm:$0xff] %v943
    %988 = vst [vmem:[%s974] ss:$9 sm:$0xff] %v944
    %989 = vst [vmem:[%s976] ss:$9 sm:$0xff] %v945
    %990 = vst [vmem:[%s978] ss:$9 sm:$0xff] %v946
    %991 = vst [vmem:[%s980] ss:$9 sm:$0xff] %v947
    %992 = vst [vmem:[%s982] ss:$9 sm:$0xff] %v948
    %v993 = vld [vmem:[#allocation1] sm:$0xff]
    %994 = vst [vmem:[#allocation1] ss:$9 sm:$0xff] %v949
    %995 = vst [vmem:[%s970] ss:$9 sm:$0xff] %v950
    %v996 = vld [vmem:[#allocation1] sm:$0xff]
    %v997 = vsel %vm728, %v984, 0
    %v999 = vsel %vm728, %v993, 0
    %v1001 = vsel %vm728, %v996, 0
    %vm1003 = vcmask 1041408
    %v1005 = vsel %vm1003, %v540, 0
    %1007 = vmatpush.msra.mxu0 0.0
    %1008 = vmatpush.msra.mxu0 0.0
    %1009 = vmatpush.msra.mxu0 0.0
    %1010 = vmatpush.msra.mxu0 0.0
    %1011 = vmatpush.msra.mxu0 0.0
    %1012 = vmatpush.msra.mxu0 0.0
    %1013 = vmatpush.msra.mxu0 0.0
    %1014 = vmatpush.msra.mxu0 0.0
    %1015 = vmatpush.msra.mxu0 0.0
    %1016 = vmatpush.msra.mxu0 0.0
    %1017 = vmatpush.msra.mxu0 0.0
    %1018 = vmatpush.msra.mxu0 0.0
    %1019 = vmatpush.msra.mxu0 0.0
    %1020 = vmatpush.msra.mxu0 0.0
    %1021 = vmatpush.msra.mxu0 0.0
    %1022 = vmatpush.msra.mxu0 %v1005
    %1023 = vmatmul.f32.gmra.mxu0 %v997
    %v1024 = vpop.f32.mrf.mxu0
    %v1025 = vadd.f32 0.0, %v1024
    %1026 = vmatmul.f32.gmra.mxu0 %v999
    %v1027 = vpop.f32.mrf.mxu0
    %v1028 = vadd.f32 0.0, %v1027
    %1029 = vmatmul.f32.gmra.mxu0 %v1001
    %v1030 = vpop.f32.mrf.mxu0
    %v1031 = vadd.f32 0.0, %v1030
    %1032 = vdwg.mxu0
    %v1036 = vrot.slane %v1025, 1
    %v1037 = vrot.slane %v1025, 2
    %v1038 = vrot.slane %v1025, 3
    %v1039 = vrot.slane %v1025, 4
    %v1040 = vrot.slane %v1025, 5
    %v1041 = vrot.slane %v1025, 6
    %v1042 = vrot.slane %v1025, 7
    %v1043 = vrot.slane %v1028, 1
    %v1044 = vrot.slane %v1028, 2
    %v1045 = vrot.slane %v1028, 3
    %v1046 = vrot.slane %v1028, 4
    %v1047 = vrot.slane %v1028, 5
    %v1048 = vrot.slane %v1028, 6
    %v1049 = vrot.slane %v1028, 7
    %v1050 = vrot.slane %v1031, 1
    %v1066 = vmul.f32 %v1025, %v420
    %v1067 = vmul.f32 %v1036, %v431
    %v1068 = vmul.f32 %v1037, %v432
    %v1069 = vmul.f32 %v1038, %v433
    %v1070 = vmul.f32 %v1039, %v434
    %v1071 = vmul.f32 %v1040, %v435
    %v1072 = vmul.f32 %v1041, %v436
    %v1073 = vmul.f32 %v1042, %v437
    %v1074 = vmul.f32 %v1028, %v422
    %v1075 = vmul.f32 %v1043, %v438
    %v1076 = vmul.f32 %v1044, %v439
    %v1077 = vmul.f32 %v1045, %v440
    %v1078 = vmul.f32 %v1046, %v441
    %v1079 = vmul.f32 %v1047, %v442
    %v1080 = vmul.f32 %v1048, %v443
    %v1081 = vmul.f32 %v1049, %v444
    %v1082 = vmul.f32 %v1031, %v425
    %v1083 = vmul.f32 %v1050, %v445
    %1102 = vst [vmem:[#allocation1] ss:$9 sm:$0xff] %v1066
    %s1103 = scalar_lea.vmem [#allocation1], 1
    %1104 = vst [vmem:[%s1103] ss:$9 sm:$0xff] %v1067
    %s1105 = scalar_lea.vmem [#allocation1], 2
    %1106 = vst [vmem:[%s1105] ss:$9 sm:$0xff] %v1068
    %s1107 = scalar_lea.vmem [#allocation1], 3
    %1108 = vst [vmem:[%s1107] ss:$9 sm:$0xff] %v1069
    %s1109 = scalar_lea.vmem [#allocation1], 4
    %1110 = vst [vmem:[%s1109] ss:$9 sm:$0xff] %v1070
    %s1111 = scalar_lea.vmem [#allocation1], 5
    %1112 = vst [vmem:[%s1111] ss:$9 sm:$0xff] %v1071
    %s1113 = scalar_lea.vmem [#allocation1], 6
    %1114 = vst [vmem:[%s1113] ss:$9 sm:$0xff] %v1072
    %s1115 = scalar_lea.vmem [#allocation1], 7
    %1116 = vst [vmem:[%s1115] ss:$9 sm:$0xff] %v1073
    %v1117 = vld [vmem:[#allocation1] sm:$0xff]
    %1118 = vst [vmem:[#allocation1] ss:$9 sm:$0xff] %v1074
    %v1119 = vld [vmem:[#allocation1] sm:$0xff]
    %1120 = vst [vmem:[#allocation1] ss:$9 sm:$0xff] %v1075
    %1121 = vst [vmem:[%s1103] ss:$9 sm:$0xff] %v1076
    %1122 = vst [vmem:[%s1105] ss:$9 sm:$0xff] %v1077
    %1123 = vst [vmem:[%s1107] ss:$9 sm:$0xff] %v1078
    %1124 = vst [vmem:[%s1109] ss:$9 sm:$0xff] %v1079
    %1125 = vst [vmem:[%s1111] ss:$9 sm:$0xff] %v1080
    %1126 = vst [vmem:[%s1113] ss:$9 sm:$0xff] %v1081
    %1127 = vst [vmem:[%s1115] ss:$9 sm:$0xff] %v1082
    %v1128 = vld [vmem:[#allocation1] sm:$0xff]
    %1129 = vst [vmem:[#allocation1] ss:$9 sm:$0xff] %v1083
    %v1130 = vld [vmem:[#allocation1] sm:$0xff]
    %v1135 = vsel %vm106, %v1117, 0.0
    %v1136 = vsel %vm110, %v1119, 0.0
    %v1137 = vadd.f32 %v1135, %v1136
    %v1138 = vrot.slane %v1137, 4
    %v1139 = vadd.f32 %v1137, %v1138
    %v1140 = vrot.slane %v1139, 2
    %v1141 = vadd.f32 %v1139, %v1140
    %v1142 = vrot.slane %v1141, 1
    %v1143 = vadd.f32 %v1141, %v1142
    %v1144 = vsel %vm106, %v1128, 0.0
    %v1145 = vsel %vm110, %v1130, 0.0
    %v1146 = vadd.f32 %v1144, %v1145
    %v1147 = vrot.slane %v1146, 4
    %v1148 = vadd.f32 %v1146, %v1147
    %v1149 = vrot.slane %v1148, 2
    %v1150 = vadd.f32 %v1148, %v1149
    %v1151 = vrot.slane %v1150, 1
    %v1152 = vadd.f32 %v1150, %v1151
    %v1153 = vpack.c.bf16 %v1143, %v1143
    %v1154 = vpack.c.bf16 %v1152, %v1152
    %v1155 = vld [vmem:[%s7] sm:$0xf]
    %v1156 = vld [vmem:[%s7 + $0x4] sm:$0xf]
    %v1157 = vld [vmem:[%s7 + $0x8] sm:$0xf]
    %v1158 = vld [vmem:[%s7 + $0xc] sm:$0xf]
    %v1159 = vperm.slane %v92, 0
    %v1162 = vunpack.c.l.b16 %v1153
    %v1163 = vunpack.c.l.b16 %v1154
    %v1164 = vsel %vm229, %v1163, %v1162
    %v1165 = vpack.c.b16 %v1164, %v1164
    %v1170 = vunpack.c.l.b16 %v1155
    %v1171 = vunpack.c.l.b16 %v1156
    %v1172 = vunpack.c.l.b16 %v1157
    %v1173 = vunpack.c.l.b16 %v1158
    %v1174 = vpack.c.b16 %v1171, %v1170
    %v1175 = vpack.c.b16 %v1173, %v1172
    %v1179 = vsel %vm106, %v1165, 0
    %1181 = vmatpush.bf16.msra.mxu0 0
    %1182 = vmatpush.bf16.msra.mxu0 0
    %1183 = vmatpush.bf16.msra.mxu0 0
    %1184 = vmatpush.bf16.msra.mxu0 0
    %1185 = vmatpush.bf16.msra.mxu0 0
    %1186 = vmatpush.bf16.msra.mxu0 0
    %1187 = vmatpush.bf16.msra.mxu0 %v1175
    %1188 = vmatpush.bf16.msra.mxu0 %v1174
    %1189 = vmatmul.bf16.gmra.mxu0 %v1179
    %v1190 = vpop.f32.mrf.mxu0
    %v1191 = vadd.f32 %v1159, %v1190
    %v1192 = vpop.f32.mrf.mxu0
    %1193 = vdwg.mxu0
    %v1194 = vperm.slane %v90, 0
    %v1195 = vmul.f32 %v1194, %v1191
    %v1196 = vadd.f32 %v85, %v1195
    %vm1197 = vcmask 254976
    %v1198 = vsel %vm1197, %v1196, 0.0
    %1199 = vadd.xlane.f32.xlu0 %v1198
    %v1200 = vpop.xlane.xlu0 %1199
    %v1201 = vmul.f32 %v1200, %v126
    %v1202 = vsub.f32 %v1196, %v1201
    %v1203 = vmul.f32 %v1202, %v1202
    %v1204 = vsel %vm1197, %v1203, 0.0
    %1205 = vadd.xlane.f32.xlu0 %v1204
    %v1206 = vpop.xlane.xlu0 %1205
    %v1207 = vmul.f32 %v1206, %v126
    %v1208 = vadd.f32 %v1207, 1e-05
    %v1209 = vrsqrt.pop %v1208
    %v1210 = vmul.f32 %v1209, %v1208
    %v1211 = vmul.f32 %v1210, %v1209
    %v1212 = vmul.f32 0.5, %v1211
    %v1213 = vsub.f32 1.5, %v1212
    %v1214 = vmul.f32 %v1209, %v1213
    %vm1215 = vweird.f32 %v1208
    %vm1216 = vweird.f32 %v1209
    %vm1217 = vmor %vm1215, %vm1216
    %v1218 = vsel %vm1217, %v1209, %v1214
    %v1219 = vmul.f32 %v1202, %v1218
    %v1220 = vperm.slane %v88, 0
    %v1221 = vmul.f32 %v1219, %v1220
    %v1222 = vperm.slane %v89, 0
    %v1223 = vadd.f32 %v1221, %v1222
    %v1224 = vpack.c.bf16 %v1223, %v1223
    %v1225 = vld [vmem:[#allocation7] sm:$0xf]
    %v1226 = vld [vmem:[#allocation7 + $0x4] sm:$0xf]
    %v1227 = vld [vmem:[#allocation7 + $0x8] sm:$0xf]
    %v1228 = vld [vmem:[#allocation7 + $0xc] sm:$0xf]
    %v1229 = vld [vmem:[%s3] sm:$0x1]
    %v1231 = vperm.slane %v1229, 0
    %v1237 = vunpack.c.l.b16 %v1225
    %v1238 = vunpack.c.l.b16 %v1226
    %v1239 = vunpack.c.l.b16 %v1227
    %v1240 = vunpack.c.l.b16 %v1228
    %v1241 = vpack.c.b16 %v1238, %v1237
    %v1242 = vpack.c.b16 %v1240, %v1239
    %v1246 = vsel %vm106, %v1224, 0
    %1248 = vmatpush.bf16.msra.mxu0 0
    %1249 = vmatpush.bf16.msra.mxu0 0
    %1250 = vmatpush.bf16.msra.mxu0 0
    %1251 = vmatpush.bf16.msra.mxu0 0
    %1252 = vmatpush.bf16.msra.mxu0 0
    %1253 = vmatpush.bf16.msra.mxu0 0
    %1254 = vmatpush.bf16.msra.mxu0 %v1242
    %1255 = vmatpush.bf16.msra.mxu0 %v1241
    %1256 = vmatmul.bf16.gmra.mxu0 %v1246
    %v1257 = vpop.f32.mrf.mxu0
    %v1258 = vadd.f32 %v1231, %v1257
    %v1259 = vpop.f32.mrf.mxu0
    %1260 = vdwg.mxu0
    %v1261 = vmul.f32 %v1258, 0.5
    %v1262 = vmul.f32 %v1258, 0.70710677
    %vm1263 = vcmp.ge.f32.partialorder %v1262, 0.0
    %v1264 = vsel %vm1263, 1.0, -1.0
    %v1265 = vand.u32 2147483647, %v1262
    %v1266 = vmul.f32 %v1265, 0.3275911
    %v1267 = vadd.f32 %v1266, 1.0
    %v1268 = vrcp.pop %v1267
    %v1269 = vmul.f32 %v1267, %v1268
    %v1270 = vsub.f32 1.0, %v1269
    %v1271 = vmul.f32 %v1268, %v1270
    %v1272 = vadd.f32 %v1268, %v1271
    %vm1273 = vweird.f32 %v1267
    %vm1274 = vweird.f32 %v1268
    %vm1275 = vmor %vm1273, %vm1274
    %v1276 = vsel %vm1275, %v1268, %v1272
    %v1277 = vand.u32 2147483647, %v1267
    %vm1278 = vcmp.eq.f32.partialorder %v1277, 8.507059e+37
    %v1279 = vand.u32 %v1267, 2147483648
    %v1280 = vor.u32 1.1754944e-38, %v1279
    %v1281 = vsel %vm1278, %v1280, %v1276
    %v1282 = vmul.f32 1.0, %v1281
    %v1283 = vmul.f32 %v1282, 1.0614054
    %v1284 = vadd.f32 %v1283, -1.4531521
    %v1285 = vmul.f32 %v1284, %v1282
    %v1286 = vadd.f32 %v1285, 1.4214138
    %v1287 = vmul.f32 %v1286, %v1282
    %v1288 = vadd.f32 %v1287, -0.28449672
    %v1289 = vmul.f32 %v1288, %v1282
    %v1290 = vadd.f32 %v1289, 0.2548296
    %v1291 = vmul.f32 %v1290, %v1282
    %v1292 = vsub.f32 0.0, %v1265
    %v1293 = vmul.f32 %v1292, %v1265
    %v1294 = vmul.f32 %v1293, 1.442695
    %v1295 = vpow.pop %v1294
    %v1296 = vmul.f32 %v1291, %v1295
    %v1297 = vsub.f32 1.0, %v1296
    %v1298 = vmul.f32 %v1264, %v1297
    %v1299 = vadd.f32 %v1298, 1.0
    %v1300 = vmul.f32 %v1261, %v1299
    %v1301 = vpack.c.bf16 %v1300, %v1300
    %v1302 = vld [vmem:[%s9] sm:$0xf]
    %v1303 = vld [vmem:[%s9 + $0x4] sm:$0xf]
    %v1304 = vld [vmem:[%s9 + $0x8] sm:$0xf]
    %v1305 = vld [vmem:[%s9 + $0xc] sm:$0xf]
    %v1306 = vld [vmem:[%s9 + $0x10] sm:$0xf]
    %v1307 = vld [vmem:[%s9 + $0x14] sm:$0xf]
    %v1308 = vld [vmem:[%s9 + $0x18] sm:$0xf]
    %v1309 = vld [vmem:[%s9 + $0x1c] sm:$0xf]
    %v1310 = vld [vmem:[%s9 + $0x20] sm:$0xf]
    %v1311 = vld [vmem:[%s9 + $0x24] sm:$0xf]
    %v1312 = vld [vmem:[%s9 + $0x28] sm:$0xf]
    %v1313 = vld [vmem:[%s9 + $0x2c] sm:$0xf]
    %v1314 = vld [vmem:[%s9 + $0x30] sm:$0xf]
    %v1315 = vld [vmem:[%s9 + $0x34] sm:$0xf]
    %v1316 = vld [vmem:[%s9 + $0x38] sm:$0xf]
    %v1317 = vld [vmem:[%s9 + $0x3c] sm:$0xf]
    %v1318 = vperm.slane %v93, 0
    %v1335 = vunpack.c.l.b16 %v1302
    %v1336 = vunpack.c.l.b16 %v1303
    %v1337 = vunpack.c.l.b16 %v1304
    %v1338 = vunpack.c.l.b16 %v1305
    %v1339 = vunpack.c.l.b16 %v1306
    %v1340 = vunpack.c.l.b16 %v1307
    %v1341 = vunpack.c.l.b16 %v1308
    %v1342 = vunpack.c.l.b16 %v1309
    %v1343 = vunpack.c.l.b16 %v1310
    %v1344 = vunpack.c.l.b16 %v1311
    %v1345 = vunpack.c.l.b16 %v1312
    %v1346 = vunpack.c.l.b16 %v1313
    %v1347 = vunpack.c.l.b16 %v1314
    %v1348 = vunpack.c.l.b16 %v1315
    %v1349 = vunpack.c.l.b16 %v1316
    %v1350 = vunpack.c.l.b16 %v1317
    %v1351 = vpack.c.b16 %v1336, %v1335
    %v1352 = vpack.c.b16 %v1338, %v1337
    %v1353 = vpack.c.b16 %v1340, %v1339
    %v1354 = vpack.c.b16 %v1342, %v1341
    %v1355 = vpack.c.b16 %v1344, %v1343
    %v1356 = vpack.c.b16 %v1346, %v1345
    %v1357 = vpack.c.b16 %v1348, %v1347
    %v1358 = vpack.c.b16 %v1350, %v1349
    %1367 = vmatpush.bf16.msra.mxu0 %v1358
    %1368 = vmatpush.bf16.msra.mxu0 %v1357
    %1369 = vmatpush.bf16.msra.mxu0 %v1356
    %1370 = vmatpush.bf16.msra.mxu0 %v1355
    %1371 = vmatpush.bf16.msra.mxu0 %v1354
    %1372 = vmatpush.bf16.msra.mxu0 %v1353
    %1373 = vmatpush.bf16.msra.mxu0 %v1352
    %1374 = vmatpush.bf16.msra.mxu0 %v1351
    %1375 = vmatmul.bf16.gmra.mxu0 %v1301
    %v1376 = vpop.f32.mrf.mxu0
    %v1377 = vadd.f32 %v1318, %v1376
    %v1378 = vpop.f32.mrf.mxu0
    %1379 = vdwg.mxu0
    %v1380 = vperm.slane %v91, 0
    %v1381 = vmul.f32 %v1380, %v1377
    %v1382 = vadd.f32 %v1196, %v1381
    %1383 = vst.msk [vmem:[#allocation8] sm:$0x3] %vm1197, %v1382
    %1384 = vst [vmem:[#allocation1] ss:$9 sm:$0xff] %v933
    %s1385 = scalar_lea.vmem [#allocation1], 1
    %1386 = vst [vmem:[%s1385] ss:$9 sm:$0xff] %v934
    %s1387 = scalar_lea.vmem [#allocation1], 2
    %1388 = vst [vmem:[%s1387] ss:$9 sm:$0xff] %v935
    %s1389 = scalar_lea.vmem [#allocation1], 3
    %1390 = vst [vmem:[%s1389] ss:$9 sm:$0xff] %v936
    %s1391 = scalar_lea.vmem [#allocation1], 4
    %1392 = vst [vmem:[%s1391] ss:$9 sm:$0xff] %v937
    %s1393 = scalar_lea.vmem [#allocation1], 5
    %1394 = vst [vmem:[%s1393] ss:$9 sm:$0xff] %v938
    %s1395 = scalar_lea.vmem [#allocation1], 6
    %1396 = vst [vmem:[%s1395] ss:$9 sm:$0xff] %v939
    %s1397 = scalar_lea.vmem [#allocation1], 7
    %1398 = vst [vmem:[%s1397] ss:$9 sm:$0xff] %v940
    %v1399 = vld [vmem:[#allocation1] sm:$0xff]
    %1400 = vst [vmem:[#allocation1] ss:$9 sm:$0xff] %v941
    %v1401 = vld [vmem:[#allocation1] sm:$0xff]
    %1402 = vst [vmem:[#allocation1] ss:$9 sm:$0xff] %v942
    %1403 = vst [vmem:[%s1385] ss:$9 sm:$0xff] %v943
    %1404 = vst [vmem:[%s1387] ss:$9 sm:$0xff] %v944
    %1405 = vst [vmem:[%s1389] ss:$9 sm:$0xff] %v945
    %1406 = vst [vmem:[%s1391] ss:$9 sm:$0xff] %v946
    %1407 = vst [vmem:[%s1393] ss:$9 sm:$0xff] %v947
    %1408 = vst [vmem:[%s1395] ss:$9 sm:$0xff] %v948
    %1409 = vst [vmem:[%s1397] ss:$9 sm:$0xff] %v949
    %v1410 = vld [vmem:[#allocation1] sm:$0xff]
    %1411 = vst [vmem:[#allocation1] ss:$9 sm:$0xff] %v950
    %v1412 = vld [vmem:[#allocation1] sm:$0xff]
    %1417 = vxpose.xlu0.b32.start [1/16] %v1399, 128
    %1418 = vxpose.xlu0.b32.cont [2/16] %v1401, 128
    %1419 = vxpose.xlu0.b32.cont [3/16] 0.0, 128
    %1420 = vxpose.xlu0.b32.cont [4/16] 0.0, 128
    %1421 = vxpose.xlu0.b32.cont [5/16] 0.0, 128
    %1422 = vxpose.xlu0.b32.cont [6/16] 0.0, 128
    %1423 = vxpose.xlu0.b32.cont [7/16] 0.0, 128
    %1424 = vxpose.xlu0.b32.cont [8/16] 0.0, 128
    %1425 = vxpose.xlu0.b32.cont [9/16] 0.0, 128
    %1426 = vxpose.xlu0.b32.cont [10/16] 0.0, 128
    %1427 = vxpose.xlu0.b32.cont [11/16] 0.0, 128
    %1428 = vxpose.xlu0.b32.cont [12/16] 0.0, 128
    %1429 = vxpose.xlu0.b32.cont [13/16] 0.0, 128
    %1430 = vxpose.xlu0.b32.cont [14/16] 0.0, 128
    %1431 = vxpose.xlu0.b32.cont [15/16] 0.0, 128
    %1432 = vxpose.xlu0.b32.end [16/16] 0.0, 128
    %v1433 = vpop.trf.xlu0
    %v1434 = vpop.trf.xlu0
    %v1435 = vpop.trf.xlu0
    %v1436 = vpop.trf.xlu0
    %v1437 = vpop.trf.xlu0
    %v1438 = vpop.trf.xlu0
    %v1439 = vpop.trf.xlu0
    %v1440 = vpop.trf.xlu0
    %v1441 = vpop.trf.xlu0
    %v1442 = vpop.trf.xlu0
    %v1443 = vpop.trf.xlu0
    %v1444 = vpop.trf.xlu0
    %v1445 = vpop.trf.xlu0
    %v1446 = vpop.trf.xlu0
    %v1447 = vpop.trf.xlu0
    %v1448 = vpop.trf.xlu0
    %1449 = vxpose.xlu0.b32.start [1/16] %v1410, 128
    %1450 = vxpose.xlu0.b32.cont [2/16] %v1412, 128
    %1451 = vxpose.xlu0.b32.cont [3/16] 0.0, 128
    %1452 = vxpose.xlu0.b32.cont [4/16] 0.0, 128
    %1453 = vxpose.xlu0.b32.cont [5/16] 0.0, 128
    %1454 = vxpose.xlu0.b32.cont [6/16] 0.0, 128
    %1455 = vxpose.xlu0.b32.cont [7/16] 0.0, 128
    %1456 = vxpose.xlu0.b32.cont [8/16] 0.0, 128
    %1457 = vxpose.xlu0.b32.cont [9/16] 0.0, 128
    %1458 = vxpose.xlu0.b32.cont [10/16] 0.0, 128
    %1459 = vxpose.xlu0.b32.cont [11/16] 0.0, 128
    %1460 = vxpose.xlu0.b32.cont [12/16] 0.0, 128
    %1461 = vxpose.xlu0.b32.cont [13/16] 0.0, 128
    %1462 = vxpose.xlu0.b32.cont [14/16] 0.0, 128
    %1463 = vxpose.xlu0.b32.cont [15/16] 0.0, 128
    %1464 = vxpose.xlu0.b32.end [16/16] 0.0, 128
    %v1465 = vpop.trf.xlu0
    %v1466 = vpop.trf.xlu0
    %v1467 = vpop.trf.xlu0
    %v1468 = vpop.trf.xlu0
    %v1469 = vpop.trf.xlu0
    %v1470 = vpop.trf.xlu0
    %v1471 = vpop.trf.xlu0
    %v1472 = vpop.trf.xlu0
    %v1473 = vpop.trf.xlu0
    %v1474 = vpop.trf.xlu0
    %v1475 = vpop.trf.xlu0
    %v1476 = vpop.trf.xlu0
    %v1477 = vpop.trf.xlu0
    %v1478 = vpop.trf.xlu0
    %v1479 = vpop.trf.xlu0
    %v1480 = vpop.trf.xlu0
    %vm1481 = vcmask 72704
    %v1482 = vsel %vm1481, %v1433, 0.0
    %v1483 = vsel %vm1481, %v1465, 0.0
    %1484 = vst [vmem:[#allocation9] sm:$0x3] %v1482
    %1485 = vst [vmem:[#allocation9 + $0x2] sm:$0x3] %v1483
    // Predicated region
    $region54: #{tpu_custom_call.1} parent=1 // pred_check
      _
    $region55: #{tpu_custom_call.1} parent=1 // pred_check_branch
      %1487 = sbr.rel (0) target = $region57
    $region56: #{tpu_custom_call.1} parent=1 // pred_region
      %1489 = vsyncadd [#allocation4], 0
      %s1491 = sshll.u32 [#allocation8], 4
      %s1492 = int_to_ptr.vmem [resolvable:$true] %s1491
      %s1493 = sshll.u32 %s10, 4
      %s1494 = int_to_ptr.hbm [resolvable:$true] %s1493
      %1496 = dma.vmem_to_hbm [thread:$0]  %s1492, 32, %s1494, [#allocation4]
    $region57: #{tpu_custom_call.1} parent=1 // pred_fallthru
      _
    // Predicated region
    $region58: #{tpu_custom_call.1} parent=1 // pred_check
      _
    $region59: #{tpu_custom_call.1} parent=1 // pred_check_branch
      %1498 = sbr.rel (0) target = $region61
    $region60: #{tpu_custom_call.1} parent=1 // pred_region
      %1500 = vsyncadd [#allocation10], 0
      %s1501 = sshll.u32 [#allocation9], 4
      %s1502 = int_to_ptr.vmem [resolvable:$true] %s1501
      %s1503 = sshll.u32 %s11, 4
      %s1504 = int_to_ptr.hbm [resolvable:$true] %s1503
      %1509 = dma.vmem_to_hbm [thread:$0]  %s1502, 64, %s1504, [#allocation10], 32, 32, 2
    $region61: #{tpu_custom_call.1} parent=1 // pred_fallthru
      _
    // Predicated region
    $region62: #{tpu_custom_call.1} parent=1 // pred_check
      _
    $region63: #{tpu_custom_call.1} parent=1 // pred_check_branch
      %1511 = sbr.rel (0) target = $region65
    $region64: #{tpu_custom_call.1} parent=1 // pred_region
      %1513 = dma.done [#allocation4], 32
    $region65: #{tpu_custom_call.1} parent=1 // pred_fallthru
      _
    // Predicated region
    $region66: #{tpu_custom_call.1} parent=1 // pred_check
      _
    $region67: #{tpu_custom_call.1} parent=1 // pred_check_branch
      %1515 = sbr.rel (0) target = $region69
    $region68: #{tpu_custom_call.1} parent=1 // pred_region
      %1517 = dma.done [#allocation10], 64
    $region69: #{tpu_custom_call.1} parent=1 // pred_fallthru
      _
    %1518 = vsyncpa [#allocation3], 1
    %1519 = vsyncpa [#allocation6], 1
    %1520 = vsyncpa [#allocation4], 1
    %1521 = vsyncpa [#allocation10], 1

</llo_original>
